<compile_context>
chip_gen: v6e
topology: v6e:2x2x1
jax: 0.10.0
libtpu: 0.0.40
codegen_flags: <defaults>
</compile_context>

<pallas_src>
import math
import functools

import jax
import jax.numpy as jnp
from jax.experimental import pallas as pl
from jax.experimental.pallas import tpu as pltpu

BN_EPS = 1e-5


def _round_up(n, m):
    return ((n + m - 1) // m) * m


# ----------------------------------------------------------------------------------
# Pallas kernels
# ----------------------------------------------------------------------------------

def _conv_stats_matmul_kernel(a_ref, b_ref, y_ref, stats_ref, acc_ref):
    """Tiled bf16 matmul with f32 accumulator. On the last K step it writes the
    output tile and the per-(row-tile, channel) sum / sum-of-squares epilogue."""
    k = pl.program_id(2)

    @pl.when(k == 0)
    def _():
        acc_ref[...] = jnp.zeros_like(acc_ref)

    acc_ref[...] += jnp.dot(a_ref[...], b_ref[...],
                            preferred_element_type=jnp.float32)

    @pl.when(k == pl.num_programs(2) - 1)
    def _():
        acc = acc_ref[...]
        y_ref[...] = acc.astype(y_ref.dtype)
        s = jnp.sum(acc, axis=0, keepdims=True)            # (1, tn)
        ss = jnp.sum(acc * acc, axis=0, keepdims=True)     # (1, tn)
        stats_ref[...] = jnp.concatenate([s, ss], axis=0)[None]   # (1, 2, tn)


def _bn_act_kernel(y_ref, scale_ref, bias_ref, o_ref, *, relu):
    """y = conv_out * scale + bias (per-channel), optional ReLU.
    scale/bias come in as a (1, C) block and broadcast inside the kernel."""
    y = y_ref[...] * scale_ref[...] + bias_ref[...]
    if relu:
        y = jnp.maximum(y, 0.0)
    o_ref[...] = y


# ----------------------------------------------------------------------------------
# Pallas wrappers
# ----------------------------------------------------------------------------------

def conv_matmul_with_stats(a_bf16, b_bf16):
    """a: (M, K) bf16 patches, b: (K, N) bf16 weights ->
       y: (Mp, Np) f32 conv output, stats: (Gi, 2, Np) f32 partial (sum, sumsq).
    Padded rows / K columns are zero, so they contribute nothing to the sums."""
    M, K = a_bf16.shape
    K2, N = b_bf16.shape
    assert K == K2

    # Output tiles: 256 when the padded problem allows it (v6e/v7x MXU), else 128.
    tm = 256 if (M >= 256 and M % 256 == 0) else 128
    Mp = _round_up(M, tm)
    Np128 = _round_up(N, 128)
    tn = 256 if Np128 % 256 == 0 else 128
    Np = _round_up(N, tn)
    # Small K: single reduction step (tk == padded K), no extra k grid steps.
    Kp = _round_up(K, 128)
    tk = Kp if Kp <= 512 else 512
    Kp = _round_up(Kp, tk)

    a_p = jnp.pad(a_bf16, ((0, Mp - M), (0, Kp - K)))
    b_p = jnp.pad(b_bf16, ((0, Kp - K), (0, Np - N)))
    gi, gj, gk = Mp // tm, Np // tn, Kp // tk

    y, stats = pl.pallas_call(
        _conv_stats_matmul_kernel,
        out_shape=(jax.ShapeDtypeStruct((Mp, Np), jnp.float32),
                   jax.ShapeDtypeStruct((gi, 2, Np), jnp.float32)),
        grid_spec=pltpu.PrefetchScalarGridSpec(
            num_scalar_prefetch=0,
            grid=(gi, gj, gk),
            in_specs=[pl.BlockSpec((tm, tk), lambda i, j, k: (i, k)),
                      pl.BlockSpec((tk, tn), lambda i, j, k: (k, j))],
            out_specs=(pl.BlockSpec((tm, tn), lambda i, j, k: (i, j)),
                       pl.BlockSpec((1, 2, tn), lambda i, j, k: (i, 0, j))),
            scratch_shapes=[pltpu.VMEM((tm, tn), jnp.float32)]),
        compiler_params=pltpu.CompilerParams(
            dimension_semantics=("parallel", "parallel", "arbitrary")),
    )(a_p, b_p)
    return y, stats


def bn_act_apply(y, scale, bias, relu):
    """Row-tiled BN apply + optional ReLU; scale/bias are per-channel (Np,)."""
    Mp, Np = y.shape
    bm = max(t for t in (1024, 512, 256, 128) if Mp % t == 0)
    out = pl.pallas_call(
        functools.partial(_bn_act_kernel, relu=relu),
        out_shape=jax.ShapeDtypeStruct((Mp, Np), jnp.float32),
        grid_spec=pltpu.PrefetchScalarGridSpec(
            num_scalar_prefetch=0,
            grid=(Mp // bm,),
            in_specs=[pl.BlockSpec((bm, Np), lambda i: (i, 0)),
                      pl.BlockSpec((1, Np), lambda i: (0, 0)),
                      pl.BlockSpec((1, Np), lambda i: (0, 0))],
            out_specs=pl.BlockSpec((bm, Np), lambda i: (i, 0))),
        compiler_params=pltpu.CompilerParams(
            dimension_semantics=("parallel",)),
    )(y, scale.reshape(1, Np).astype(jnp.float32),
      bias.reshape(1, Np).astype(jnp.float32))
    return out


# ----------------------------------------------------------------------------------
# ConvBlock forward (JAX glue around the Pallas kernels)
# ----------------------------------------------------------------------------------

def im2col(x, kh, kw, stride, padding):
    """x: (N, H, W, C) NHWC -> (N*Ho*Wo, kh*kw*C); feature order is (kh, kw, C)."""
    N, H, W, C = x.shape
    xp = jnp.pad(x, ((0, 0), (padding, padding), (padding, padding), (0, 0)))
    Ho = (H + 2 * padding - kh) // stride + 1
    Wo = (W + 2 * padding - kw) // stride + 1
    cols = []
    for i in range(kh):
        for j in range(kw):
            cols.append(xp[:, i:i + (Ho - 1) * stride + 1:stride,
                              j:j + (Wo - 1) * stride + 1:stride, :])
    cols = jnp.concatenate(cols, axis=-1)
    return cols.reshape(N * Ho * Wo, kh * kw * C), (N, Ho, Wo)


def conv_block_forward(params, x_nchw, *, stride=1, padding=1, with_nonlinearity=True):
    """ConvBlock: Conv2d(bias=True) -> BatchNorm2d (training-mode batch statistics)
    -> optional ReLU.  Input/output layout: NCHW (PyTorch convention)."""
    w = params['conv_w']               # (Cout, Cin, kh, kw)
    conv_b = params['conv_b']          # (Cout,)
    gamma = params['bn_gamma']         # (Cout,)
    beta = params['bn_beta']           # (Cout,)
    cout, cin, kh, kw = w.shape

    x = jnp.transpose(x_nchw, (0, 2, 3, 1)).astype(jnp.bfloat16)   # NHWC bf16 MXU operand
    Nb, H, Wd, _ = x.shape

    if kh == 1 and kw == 1 and padding == 0 and stride == 1:
        cols = x.reshape(Nb * H * Wd, cin)         # 1x1 conv: skip im2col entirely
        Ho, Wo = H, Wd
    else:
        # TODO(synk): im2col materializes a kh*kw-expanded patch matrix in HBM;
        # folding patch extraction into the matmul A-BlockSpec would remove that copy.
        cols, (Nb, Ho, Wo) = im2col(x, kh, kw, stride, padding)

    M = Nb * Ho * Wo
    wmat = jnp.transpose(w, (2, 3, 1, 0)).reshape(kh * kw * cin, cout).astype(jnp.bfloat16)

    y, stats = conv_matmul_with_stats(cols, wmat)          # y: (Mp, Np) f32
    Np = y.shape[1]

    # Finish the tiny stats reduction in JAX (Gi x 2 x Np -> 2 x Np).
    tot = jnp.sum(stats, axis=0)
    mean_conv = tot[0] / M                                  # bias-free conv mean
    # NOTE: E[x^2]-E[x]^2 can lose precision for large activations; fine at these
    # scales and clamped at 0 for safety.
    var = jnp.maximum(tot[1] / M - mean_conv * mean_conv, 0.0)

    def _pad_c(v):
        return jnp.pad(v.astype(jnp.float32), (0, Np - cout))

    gamma_p, beta_p, convb_p = _pad_c(gamma), _pad_c(beta), _pad_c(conv_b)
    scale_eff = gamma_p * jax.lax.rsqrt(var + BN_EPS)
    # Training-mode BN with batch stats cancels the conv bias:
    #   (conv + b - (mean_conv + b)) * scale == (conv - mean_conv) * scale.
    mean_full = mean_conv + convb_p
    bias_eff = beta_p + (convb_p - mean_full) * scale_eff

    out = bn_act_apply(y, scale_eff, bias_eff, relu=with_nonlinearity)
    out = out[:M, :cout].reshape(Nb, Ho, Wo, cout)
    return jnp.transpose(out, (0, 3, 1, 2)).astype(x_nchw.dtype)   # back to NCHW


# ----------------------------------------------------------------------------------
# Reference (plain JAX) and deterministic init
# ----------------------------------------------------------------------------------

def reference_forward(params, x_nchw, *, stride=1, padding=1, with_nonlinearity=True):
    # Inputs pre-rounded to bf16 to mirror the MXU operand cast in the Pallas path.
    x = x_nchw.astype(jnp.bfloat16).astype(jnp.float32)
    w = params['conv_w'].astype(jnp.bfloat16).astype(jnp.float32)
    y = jax.lax.conv_general_dilated(
        x, w, window_strides=(stride, stride),
        padding=[(padding, padding), (padding, padding)],
        dimension_numbers=('NCHW', 'OIHW', 'NCHW'),
        precision=jax.lax.Precision.HIGHEST)
    y = y + params['conv_b'][None, :, None, None]
    mean = jnp.mean(y, axis=(0, 2, 3), keepdims=True)
    var = jnp.var(y, axis=(0, 2, 3), keepdims=True)
    out = (y - mean) * jax.lax.rsqrt(var + BN_EPS)
    out = out * params['bn_gamma'][None, :, None, None] + params['bn_beta'][None, :, None, None]
    if with_nonlinearity:
        out = jnp.maximum(out, 0.0)
    return out


def init_params(key, in_channels, out_channels, kernel_size=3):
    kw_, kb_ = jax.random.split(key)
    fan_in = in_channels * kernel_size * kernel_size
    w = jax.random.normal(
        kw_, (out_channels, in_channels, kernel_size, kernel_size),
        jnp.float32) * math.sqrt(2.0 / fan_in)
    bound = 1.0 / math.sqrt(fan_in)
    b = jax.random.uniform(kb_, (out_channels,), jnp.float32, -bound, bound)
    return {
        'conv_w': w,
        'conv_b': b,
        'bn_gamma': jnp.ones((out_channels,), jnp.float32),
        'bn_beta': jnp.zeros((out_channels,), jnp.float32),
    }


# ----------------------------------------------------------------------------------

if __name__ == "__main__":
    key = jax.random.PRNGKey(0)
    pkey, xkey = jax.random.split(key)

    in_channels, out_channels = 4, 8
    params = init_params(pkey, in_channels, out_channels, kernel_size=3)
    x = jax.random.normal(xkey, (2, in_channels, 16, 16), jnp.float32)

    fwd = jax.jit(functools.partial(conv_block_forward, params,
                                    stride=1, padding=1, with_nonlinearity=True))
    out = fwd(x)
    jax.block_until_ready(out)
    assert out.shape == (2, out_channels, 16, 16)

    ref = reference_forward(params, x, stride=1, padding=1, with_nonlinearity=True)
    err = float(jnp.max(jnp.abs(out - ref)))
    assert err < 2e-2, f"max abs err vs reference = {err}"
    print("KERNEL_OK")
</pallas_src>

<mosaic_0001>
module attributes {stable_mosaic.version = 11 : i64} {
  func.func @_conv_stats_matmul_kernel(%arg0: i32, %arg1: i32, %arg2: i32, %arg3: memref<256x128xbf16, #tpu.memory_space<vmem>>, %arg4: memref<128x128xbf16, #tpu.memory_space<vmem>>, %arg5: memref<256x128xf32, #tpu.memory_space<vmem>>, %arg6: memref<1x2x128xf32, #tpu.memory_space<vmem>>, %arg7: memref<256x128xf32, #tpu.memory_space<vmem>>) attributes {dimension_semantics = [#tpu.dimension_semantics<parallel>, #tpu.dimension_semantics<parallel>, #tpu.dimension_semantics<arbitrary>], iteration_bounds = array<i64: 2, 1, 1>, scalar_prefetch = 0 : i64, scratch_operands = 1 : i64, tpu.core_type = #tpu.core_type<tc>, window_params = [{transform_indices = @transform_0, window_bounds = array<i64: 256, 128>}, {transform_indices = @transform_1, window_bounds = array<i64: 128, 128>}, {transform_indices = @transform_2, window_bounds = array<i64: 256, 128>}, {transform_indices = @transform_3, window_bounds = array<i64: 1, 2, 128>}]} {
    %c0_i32 = arith.constant 0 : i32
    %0 = arith.cmpi eq, %arg2, %c0_i32 : i32
    %1 = arith.extui %0 : i1 to i32
    %c0_i32_0 = arith.constant 0 : i32
    %2 = arith.cmpi ne, %1, %c0_i32_0 : i32
    scf.if %2 {
      %cst_10 = arith.constant 0.000000e+00 : f32
      %12 = vector.broadcast %cst_10 : f32 to vector<256x128xf32>
      %c0_11 = arith.constant 0 : index
      %c0_12 = arith.constant 0 : index
      %13 = vector.load %arg7[%c0_11, %c0_12] : memref<256x128xf32, #tpu.memory_space<vmem>>, vector<256x128xf32>
      tpu.vector_store %arg7[%c0_11, %c0_12], %12 {strides = array<i32>} : memref<256x128xf32, #tpu.memory_space<vmem>>, vector<256x128xf32>,
    } else {
    }
    %c0 = arith.constant 0 : index
    %c0_1 = arith.constant 0 : index
    %3 = vector.load %arg7[%c0, %c0_1] : memref<256x128xf32, #tpu.memory_space<vmem>>, vector<256x128xf32>
    %c0_2 = arith.constant 0 : index
    %c0_3 = arith.constant 0 : index
    %4 = vector.load %arg3[%c0_2, %c0_3] : memref<256x128xbf16, #tpu.memory_space<vmem>>, vector<256x128xbf16>
    %c0_4 = arith.constant 0 : index
    %c0_5 = arith.constant 0 : index
    %5 = vector.load %arg4[%c0_4, %c0_5] : memref<128x128xbf16, #tpu.memory_space<vmem>>, vector<128x128xbf16>
    %cst = arith.constant dense<0.000000e+00> : vector<256x128xf32>
    %6 = tpu.matmul %4, %5, %cst {dimension_numbers = #tpu.dot_dimension_numbers<[1], [0], [0], [1], [0, 0, 1, 1], [], []>} : vector<256x128xbf16>, vector<128x128xbf16>, vector<256x128xf32> -> vector<256x128xf32>
    %7 = arith.addf %3, %6 : vector<256x128xf32>
    %c0_6 = arith.constant 0 : index
    %c0_7 = arith.constant 0 : index
    %8 = vector.load %arg7[%c0_6, %c0_7] : memref<256x128xf32, #tpu.memory_space<vmem>>, vector<256x128xf32>
    tpu.vector_store %arg7[%c0_6, %c0_7], %7 {strides = array<i32>} : memref<256x128xf32, #tpu.memory_space<vmem>>, vector<256x128xf32>,
    %c0_i32_8 = arith.constant 0 : i32
    %9 = arith.cmpi eq, %arg2, %c0_i32_8 : i32
    %10 = arith.extui %9 : i1 to i32
    %c0_i32_9 = arith.constant 0 : i32
    %11 = arith.cmpi ne, %10, %c0_i32_9 : i32
    scf.if %11 {
      %c0_10 = arith.constant 0 : index
      %c0_11 = arith.constant 0 : index
      %12 = vector.load %arg7[%c0_10, %c0_11] : memref<256x128xf32, #tpu.memory_space<vmem>>, vector<256x128xf32>
      %c0_12 = arith.constant 0 : index
      %c0_13 = arith.constant 0 : index
      %13 = vector.load %arg5[%c0_12, %c0_13] : memref<256x128xf32, #tpu.memory_space<vmem>>, vector<256x128xf32>
      tpu.vector_store %arg5[%c0_12, %c0_13], %12 {strides = array<i32>} : memref<256x128xf32, #tpu.memory_space<vmem>>, vector<256x128xf32>,
      %cst_14 = arith.constant dense<0.000000e+00> : vector<128xf32>
      %14 = vector.multi_reduction <add>, %12, %cst_14 [0] : vector<256x128xf32> to vector<128xf32>
      %15 = vector.shape_cast %14 : vector<128xf32> to vector<1x128xf32>
      %16 = arith.mulf %12, %12 : vector<256x128xf32>
      %cst_15 = arith.constant dense<0.000000e+00> : vector<128xf32>
      %17 = vector.multi_reduction <add>, %16, %cst_15 [0] : vector<256x128xf32> to vector<128xf32>
      %18 = vector.shape_cast %17 : vector<128xf32> to vector<1x128xf32>
      %19 = tpu.concatenate %15, %18 in 0 : vector<1x128xf32>, vector<1x128xf32> -> vector<2x128xf32>
      %20 = vector.shape_cast %19 : vector<2x128xf32> to vector<1x2x128xf32>
      %c0_16 = arith.constant 0 : index
      %c0_17 = arith.constant 0 : index
      %c0_18 = arith.constant 0 : index
      %21 = vector.load %arg6[%c0_16, %c0_17, %c0_18] : memref<1x2x128xf32, #tpu.memory_space<vmem>>, vector<1x2x128xf32>
      tpu.vector_store %arg6[%c0_16, %c0_17, %c0_18], %20 {strides = array<i32>} : memref<1x2x128xf32, #tpu.memory_space<vmem>>, vector<1x2x128xf32>,
    } else {
    }
    return
  }
  func.func @transform_0(%arg0: i32, %arg1: i32, %arg2: i32) -> (i32, i32) {
    %c0_i32 = arith.constant 0 : i32
    return %arg0, %arg2 : i32, i32
  }
  func.func @transform_1(%arg0: i32, %arg1: i32, %arg2: i32) -> (i32, i32) {
    %c0_i32 = arith.constant 0 : i32
    return %arg2, %arg1 : i32, i32
  }
  func.func @transform_2(%arg0: i32, %arg1: i32, %arg2: i32) -> (i32, i32) {
    %c0_i32 = arith.constant 0 : i32
    return %arg0, %arg1 : i32, i32
  }
  func.func @transform_3(%arg0: i32, %arg1: i32, %arg2: i32) -> (i32, i32, i32) {
    %c0_i32 = arith.constant 0 : i32
    %c0_i32_0 = arith.constant 0 : i32
    return %arg0, %c0_i32, %arg1 : i32, i32, i32
  }
}

module attributes {stable_mosaic.version = 11 : i64} {
  func.func @_bn_act_kernel(%arg0: i32, %arg1: memref<512x128xf32, #tpu.memory_space<vmem>>, %arg2: memref<1x128xf32, #tpu.memory_space<vmem>>, %arg3: memref<1x128xf32, #tpu.memory_space<vmem>>, %arg4: memref<512x128xf32, #tpu.memory_space<vmem>>) attributes {dimension_semantics = [#tpu.dimension_semantics<parallel>], iteration_bounds = array<i64: 1>, scalar_prefetch = 0 : i64, scratch_operands = 0 : i64, tpu.core_type = #tpu.core_type<tc>, window_params = [{transform_indices = @transform_0, window_bounds = array<i64: 512, 128>}, {pipeline_mode = #tpu.pipeline_mode<synchronous>, transform_indices = @transform_1, window_bounds = array<i64: 1, 128>}, {pipeline_mode = #tpu.pipeline_mode<synchronous>, transform_indices = @transform_2, window_bounds = array<i64: 1, 128>}, {transform_indices = @transform_3, window_bounds = array<i64: 512, 128>}]} {
    %c0 = arith.constant 0 : index
    %c0_0 = arith.constant 0 : index
    %0 = vector.load %arg1[%c0, %c0_0] : memref<512x128xf32, #tpu.memory_space<vmem>>, vector<512x128xf32>
    %c0_1 = arith.constant 0 : index
    %c0_2 = arith.constant 0 : index
    %1 = vector.load %arg2[%c0_1, %c0_2] : memref<1x128xf32, #tpu.memory_space<vmem>>, vector<1x128xf32>
    %2 = vector.broadcast %1 : vector<1x128xf32> to vector<512x128xf32>
    %3 = arith.mulf %0, %2 : vector<512x128xf32>
    %c0_3 = arith.constant 0 : index
    %c0_4 = arith.constant 0 : index
    %4 = vector.load %arg3[%c0_3, %c0_4] : memref<1x128xf32, #tpu.memory_space<vmem>>, vector<1x128xf32>
    %5 = vector.broadcast %4 : vector<1x128xf32> to vector<512x128xf32>
    %6 = arith.addf %3, %5 : vector<512x128xf32>
    %cst = arith.constant 0.000000e+00 : f32
    %7 = vector.broadcast %cst : f32 to vector<512x128xf32>
    %8 = arith.maximumf %6, %7 : vector<512x128xf32>
    %c0_5 = arith.constant 0 : index
    %c0_6 = arith.constant 0 : index
    %9 = vector.load %arg4[%c0_5, %c0_6] : memref<512x128xf32, #tpu.memory_space<vmem>>, vector<512x128xf32>
    tpu.vector_store %arg4[%c0_5, %c0_6], %8 {strides = array<i32>} : memref<512x128xf32, #tpu.memory_space<vmem>>, vector<512x128xf32>,
    return
  }
  func.func @transform_0(%arg0: i32) -> (i32, i32) {
    %c0_i32 = arith.constant 0 : i32
    %c0_i32_0 = arith.constant 0 : i32
    return %arg0, %c0_i32 : i32, i32
  }
  func.func @transform_1(%arg0: i32) -> (i32, i32) {
    %c0_i32 = arith.constant 0 : i32
    %c0_i32_0 = arith.constant 0 : i32
    %c0_i32_1 = arith.constant 0 : i32
    return %c0_i32, %c0_i32_0 : i32, i32
  }
  func.func @transform_2(%arg0: i32) -> (i32, i32) {
    %c0_i32 = arith.constant 0 : i32
    %c0_i32_0 = arith.constant 0 : i32
    %c0_i32_1 = arith.constant 0 : i32
    return %c0_i32, %c0_i32_0 : i32, i32
  }
  func.func @transform_3(%arg0: i32) -> (i32, i32) {
    %c0_i32 = arith.constant 0 : i32
    %c0_i32_0 = arith.constant 0 : i32
    return %arg0, %c0_i32 : i32, i32
  }
}

</mosaic_0001>

<llo_original>
// kernel: conv_block_forward.3
$region0: #{conv_block_forward.3}
  #allocation0 [shape = 'u32[]', space=smem, size = 0x4, offset = 0x4, fixed_abs, tag = 'smem constant byte address 0x4 - core index']
  #allocation1 [shape = 'u32[144,128]{1,0:T(1,128)}', space=vmem, size = 0x12000, scoped, tag = 'internal scratch']
  %s0 = inlined_call_operand.vmem [shape: f32[512,128], index: 0, kind: input, shape index: {}]
  %s1 = inlined_call_operand.vmem [shape: f32[1,128], index: 1, kind: input, shape index: {}]
  %s2 = inlined_call_operand.vmem [shape: f32[1,128], index: 2, kind: input, shape index: {}]
  %s3 = inlined_call_operand.vmem [shape: f32[512,128], index: 3, kind: output, shape index: {}]
  %s4 = sld [smem:[#allocation0]]
  $region22: #{conv_block_forward.3} parent=0
    _
  %s6 = ssub.s32 1, %s4
  %s7 = scalar_select 0, %s6, %s4
  // Predicated region
  $region2: #{conv_block_forward.3} parent=0 // pred_check
    _
  $region3: #{conv_block_forward.3} parent=0 // pred_check_branch
    %9 = sbr.rel (0) target = $region5
  $region4: #{conv_block_forward.3} parent=0 // pred_region
    _
  $region5: #{conv_block_forward.3} parent=0 // pred_fallthru
    _
  // Predicated region
  $region6: #{conv_block_forward.3} parent=0 // pred_check
    _
  $region7: #{conv_block_forward.3} parent=0 // pred_check_branch
    %11 = sbr.rel (0) target = $region9
  $region8: #{conv_block_forward.3} parent=0 // pred_region
    _
  $region9: #{conv_block_forward.3} parent=0 // pred_fallthru
    _
  // Predicated region
  $region10: #{conv_block_forward.3} parent=0 // pred_check
    _
  $region11: #{conv_block_forward.3} parent=0 // pred_check_branch
    %13 = sbr.rel (0) target = $region13
  $region12: #{conv_block_forward.3} parent=0 // pred_region
    _
  $region13: #{conv_block_forward.3} parent=0 // pred_fallthru
    _
  %v14 = vld [vmem:[%s0] sm:$0xff]
  %v15 = vld [vmem:[%s0 + $0x8] sm:$0xff]
  %v16 = vld [vmem:[%s0 + $0x10] sm:$0xff]
  %v17 = vld [vmem:[%s0 + $0x18] sm:$0xff]
  %v18 = vld [vmem:[%s0 + $0x20] sm:$0xff]
  %v19 = vld [vmem:[%s0 + $0x28] sm:$0xff]
  %v20 = vld [vmem:[%s0 + $0x30] sm:$0xff]
  %v21 = vld [vmem:[%s0 + $0x38] sm:$0xff]
  %v22 = vld [vmem:[%s0 + $0x40] sm:$0xff]
  %v23 = vld [vmem:[%s0 + $0x48] sm:$0xff]
  %v24 = vld [vmem:[%s0 + $0x50] sm:$0xff]
  %v25 = vld [vmem:[%s0 + $0x58] sm:$0xff]
  %v26 = vld [vmem:[%s0 + $0x60] sm:$0xff]
  %v27 = vld [vmem:[%s0 + $0x68] sm:$0xff]
  %v28 = vld [vmem:[%s0 + $0x70] sm:$0xff]
  %v29 = vld [vmem:[%s0 + $0x78] sm:$0xff]
  %v30 = vld [vmem:[%s0 + $0x80] sm:$0xff]
  %v31 = vld [vmem:[%s0 + $0x88] sm:$0xff]
  %v32 = vld [vmem:[%s0 + $0x90] sm:$0xff]
  %v33 = vld [vmem:[%s0 + $0x98] sm:$0xff]
  %v34 = vld [vmem:[%s0 + $0xa0] sm:$0xff]
  %v35 = vld [vmem:[%s0 + $0xa8] sm:$0xff]
  %v36 = vld [vmem:[%s0 + $0xb0] sm:$0xff]
  %v37 = vld [vmem:[%s0 + $0xb8] sm:$0xff]
  %v38 = vld [vmem:[%s0 + $0xc0] sm:$0xff]
  %v39 = vld [vmem:[%s0 + $0xc8] sm:$0xff]
  %v40 = vld [vmem:[%s0 + $0xd0] sm:$0xff]
  %v41 = vld [vmem:[%s0 + $0xd8] sm:$0xff]
  %v42 = vld [vmem:[%s0 + $0xe0] sm:$0xff]
  %v43 = vld [vmem:[%s0 + $0xe8] sm:$0xff]
  %v44 = vld [vmem:[%s0 + $0xf0] sm:$0xff]
  %v45 = vld [vmem:[%s0 + $0xf8] sm:$0xff]
  %v46 = vld [vmem:[%s0 + $0x100] sm:$0xff]
  %v47 = vld [vmem:[%s0 + $0x108] sm:$0xff]
  %v48 = vld [vmem:[%s0 + $0x110] sm:$0xff]
  %v49 = vld [vmem:[%s0 + $0x118] sm:$0xff]
  %v50 = vld [vmem:[%s0 + $0x120] sm:$0xff]
  %v51 = vld [vmem:[%s0 + $0x128] sm:$0xff]
  %v52 = vld [vmem:[%s0 + $0x130] sm:$0xff]
  %v53 = vld [vmem:[%s0 + $0x138] sm:$0xff]
  %v54 = vld [vmem:[%s0 + $0x140] sm:$0xff]
  %v55 = vld [vmem:[%s0 + $0x148] sm:$0xff]
  %v56 = vld [vmem:[%s0 + $0x150] sm:$0xff]
  %v57 = vld [vmem:[%s0 + $0x158] sm:$0xff]
  %v58 = vld [vmem:[%s0 + $0x160] sm:$0xff]
  %v59 = vld [vmem:[%s0 + $0x168] sm:$0xff]
  %v60 = vld [vmem:[%s0 + $0x170] sm:$0xff]
  %v61 = vld [vmem:[%s0 + $0x178] sm:$0xff]
  %v62 = vld [vmem:[%s0 + $0x180] sm:$0xff]
  %v63 = vld [vmem:[%s0 + $0x188] sm:$0xff]
  %v64 = vld [vmem:[%s0 + $0x190] sm:$0xff]
  %v65 = vld [vmem:[%s0 + $0x198] sm:$0xff]
  %v66 = vld [vmem:[%s0 + $0x1a0] sm:$0xff]
  %v67 = vld [vmem:[%s0 + $0x1a8] sm:$0xff]
  %v68 = vld [vmem:[%s0 + $0x1b0] sm:$0xff]
  %v69 = vld [vmem:[%s0 + $0x1b8] sm:$0xff]
  %v70 = vld [vmem:[%s0 + $0x1c0] sm:$0xff]
  %v71 = vld [vmem:[%s0 + $0x1c8] sm:$0xff]
  %v72 = vld [vmem:[%s0 + $0x1d0] sm:$0xff]
  %v73 = vld [vmem:[%s0 + $0x1d8] sm:$0xff]
  %v74 = vld [vmem:[%s0 + $0x1e0] sm:$0xff]
  %v75 = vld [vmem:[%s0 + $0x1e8] sm:$0xff]
  %v76 = vld [vmem:[%s0 + $0x1f0] sm:$0xff]
  %v77 = vld [vmem:[%s0 + $0x1f8] sm:$0xff]
  %v78 = vld [vmem:[%s1] sm:$0x1]
  %v80 = vlaneseq
  %v81 = vshrl.u32 %v80, 7
  %v82 = vsub.s32 0, %v81
  %v83 = vrot.slane %v78, %v82
  %v85 = vmul.f32 %v14, %v83
  %v86 = vmul.f32 %v15, %v83
  %v87 = vmul.f32 %v16, %v83
  %v88 = vmul.f32 %v17, %v83
  %v89 = vmul.f32 %v18, %v83
  %v90 = vmul.f32 %v19, %v83
  %v91 = vmul.f32 %v20, %v83
  %v92 = vmul.f32 %v21, %v83
  %v93 = vmul.f32 %v22, %v83
  %v94 = vmul.f32 %v23, %v83
  %v95 = vmul.f32 %v24, %v83
  %v96 = vmul.f32 %v25, %v83
  %v97 = vmul.f32 %v26, %v83
  %v98 = vmul.f32 %v27, %v83
  %v99 = vmul.f32 %v28, %v83
  %v100 = vmul.f32 %v29, %v83
  %v101 = vmul.f32 %v30, %v83
  %v102 = vmul.f32 %v31, %v83
  %v103 = vmul.f32 %v32, %v83
  %v104 = vmul.f32 %v33, %v83
  %v105 = vmul.f32 %v34, %v83
  %v106 = vmul.f32 %v35, %v83
  %v107 = vmul.f32 %v36, %v83
  %v108 = vmul.f32 %v37, %v83
  %v109 = vmul.f32 %v38, %v83
  %v110 = vmul.f32 %v39, %v83
  %v111 = vmul.f32 %v40, %v83
  %v112 = vmul.f32 %v41, %v83
  %v113 = vmul.f32 %v42, %v83
  %v114 = vmul.f32 %v43, %v83
  %v115 = vmul.f32 %v44, %v83
  %v116 = vmul.f32 %v45, %v83
  %v117 = vmul.f32 %v46, %v83
  %v118 = vmul.f32 %v47, %v83
  %v119 = vmul.f32 %v48, %v83
  %v120 = vmul.f32 %v49, %v83
  %v121 = vmul.f32 %v50, %v83
  %v122 = vmul.f32 %v51, %v83
  %v123 = vmul.f32 %v52, %v83
  %v124 = vmul.f32 %v53, %v83
  %v125 = vmul.f32 %v54, %v83
  %v126 = vmul.f32 %v55, %v83
  %v127 = vmul.f32 %v56, %v83
  %v128 = vmul.f32 %v57, %v83
  %v129 = vmul.f32 %v58, %v83
  %v130 = vmul.f32 %v59, %v83
  %v131 = vmul.f32 %v60, %v83
  %v132 = vmul.f32 %v61, %v83
  %v133 = vmul.f32 %v62, %v83
  %v134 = vmul.f32 %v63, %v83
  %v135 = vmul.f32 %v64, %v83
  %v136 = vmul.f32 %v65, %v83
  %v137 = vmul.f32 %v66, %v83
  %v138 = vmul.f32 %v67, %v83
  %v139 = vmul.f32 %v68, %v83
  %v140 = vmul.f32 %v69, %v83
  %v141 = vmul.f32 %v70, %v83
  %v142 = vmul.f32 %v71, %v83
  %v143 = vmul.f32 %v72, %v83
  %v144 = vmul.f32 %v73, %v83
  %v145 = vmul.f32 %v74, %v83
  %v146 = vmul.f32 %v75, %v83
  %v147 = vmul.f32 %v76, %v83
  %v148 = vmul.f32 %v77, %v83
  %v149 = vld [vmem:[%s2] sm:$0x1]
  %v151 = vlaneseq
  %v152 = vshrl.u32 %v151, 7
  %v153 = vsub.s32 0, %v152
  %v154 = vrot.slane %v149, %v153
  %v156 = vadd.f32 %v85, %v154
  %v157 = vadd.f32 %v86, %v154
  %v158 = vadd.f32 %v87, %v154
  %v159 = vadd.f32 %v88, %v154
  %v160 = vadd.f32 %v89, %v154
  %v161 = vadd.f32 %v90, %v154
  %v162 = vadd.f32 %v91, %v154
  %v163 = vadd.f32 %v92, %v154
  %v164 = vadd.f32 %v93, %v154
  %v165 = vadd.f32 %v94, %v154
  %v166 = vadd.f32 %v95, %v154
  %v167 = vadd.f32 %v96, %v154
  %v168 = vadd.f32 %v97, %v154
  %v169 = vadd.f32 %v98, %v154
  %v170 = vadd.f32 %v99, %v154
  %v171 = vadd.f32 %v100, %v154
  %v172 = vadd.f32 %v101, %v154
  %v173 = vadd.f32 %v102, %v154
  %v174 = vadd.f32 %v103, %v154
  %v175 = vadd.f32 %v104, %v154
  %v176 = vadd.f32 %v105, %v154
  %v177 = vadd.f32 %v106, %v154
  %v178 = vadd.f32 %v107, %v154
  %v179 = vadd.f32 %v108, %v154
  %v180 = vadd.f32 %v109, %v154
  %v181 = vadd.f32 %v110, %v154
  %v182 = vadd.f32 %v111, %v154
  %v183 = vadd.f32 %v112, %v154
  %v184 = vadd.f32 %v113, %v154
  %v185 = vadd.f32 %v114, %v154
  %v186 = vadd.f32 %v115, %v154
  %v187 = vadd.f32 %v116, %v154
  %v188 = vadd.f32 %v117, %v154
  %v189 = vadd.f32 %v118, %v154
  %v190 = vadd.f32 %v119, %v154
  %v191 = vadd.f32 %v120, %v154
  %v192 = vadd.f32 %v121, %v154
  %v193 = vadd.f32 %v122, %v154
  %v194 = vadd.f32 %v123, %v154
  %v195 = vadd.f32 %v124, %v154
  %v196 = vadd.f32 %v125, %v154
  %v197 = vadd.f32 %v126, %v154
  %v198 = vadd.f32 %v127, %v154
  %v199 = vadd.f32 %v128, %v154
  %v200 = vadd.f32 %v129, %v154
  %v201 = vadd.f32 %v130, %v154
  %v202 = vadd.f32 %v131, %v154
  %v203 = vadd.f32 %v132, %v154
  %v204 = vadd.f32 %v133, %v154
  %v205 = vadd.f32 %v134, %v154
  %v206 = vadd.f32 %v135, %v154
  %v207 = vadd.f32 %v136, %v154
  %v208 = vadd.f32 %v137, %v154
  %v209 = vadd.f32 %v138, %v154
  %v210 = vadd.f32 %v139, %v154
  %v211 = vadd.f32 %v140, %v154
  %v212 = vadd.f32 %v141, %v154
  %v213 = vadd.f32 %v142, %v154
  %v214 = vadd.f32 %v143, %v154
  %v215 = vadd.f32 %v144, %v154
  %v216 = vadd.f32 %v145, %v154
  %v217 = vadd.f32 %v146, %v154
  %v218 = vadd.f32 %v147, %v154
  %v219 = vadd.f32 %v148, %v154
  %v220 = vmax.f32 %v156, 0.0
  %v221 = vmax.f32 %v157, 0.0
  %v222 = vmax.f32 %v158, 0.0
  %v223 = vmax.f32 %v159, 0.0
  %v224 = vmax.f32 %v160, 0.0
  %v225 = vmax.f32 %v161, 0.0
  %v226 = vmax.f32 %v162, 0.0
  %v227 = vmax.f32 %v163, 0.0
  %v228 = vmax.f32 %v164, 0.0
  %v229 = vmax.f32 %v165, 0.0
  %v230 = vmax.f32 %v166, 0.0
  %v231 = vmax.f32 %v167, 0.0
  %v232 = vmax.f32 %v168, 0.0
  %v233 = vmax.f32 %v169, 0.0
  %v234 = vmax.f32 %v170, 0.0
  %v235 = vmax.f32 %v171, 0.0
  %v236 = vmax.f32 %v172, 0.0
  %v237 = vmax.f32 %v173, 0.0
  %v238 = vmax.f32 %v174, 0.0
  %v239 = vmax.f32 %v175, 0.0
  %v240 = vmax.f32 %v176, 0.0
  %v241 = vmax.f32 %v177, 0.0
  %v242 = vmax.f32 %v178, 0.0
  %v243 = vmax.f32 %v179, 0.0
  %v244 = vmax.f32 %v180, 0.0
  %v245 = vmax.f32 %v181, 0.0
  %v246 = vmax.f32 %v182, 0.0
  %v247 = vmax.f32 %v183, 0.0
  %v248 = vmax.f32 %v184, 0.0
  %v249 = vmax.f32 %v185, 0.0
  %v250 = vmax.f32 %v186, 0.0
  %v251 = vmax.f32 %v187, 0.0
  %v252 = vmax.f32 %v188, 0.0
  %v253 = vmax.f32 %v189, 0.0
  %v254 = vmax.f32 %v190, 0.0
  %v255 = vmax.f32 %v191, 0.0
  %v256 = vmax.f32 %v192, 0.0
  %v257 = vmax.f32 %v193, 0.0
  %v258 = vmax.f32 %v194, 0.0
  %v259 = vmax.f32 %v195, 0.0
  %v260 = vmax.f32 %v196, 0.0
  %v261 = vmax.f32 %v197, 0.0
  %v262 = vmax.f32 %v198, 0.0
  %v263 = vmax.f32 %v199, 0.0
  %v264 = vmax.f32 %v200, 0.0
  %v265 = vmax.f32 %v201, 0.0
  %v266 = vmax.f32 %v202, 0.0
  %v267 = vmax.f32 %v203, 0.0
  %v268 = vmax.f32 %v204, 0.0
  %v269 = vmax.f32 %v205, 0.0
  %v270 = vmax.f32 %v206, 0.0
  %v271 = vmax.f32 %v207, 0.0
  %v272 = vmax.f32 %v208, 0.0
  %v273 = vmax.f32 %v209, 0.0
  %v274 = vmax.f32 %v210, 0.0
  %v275 = vmax.f32 %v211, 0.0
  %v276 = vmax.f32 %v212, 0.0
  %v277 = vmax.f32 %v213, 0.0
  %v278 = vmax.f32 %v214, 0.0
  %v279 = vmax.f32 %v215, 0.0
  %v280 = vmax.f32 %v216, 0.0
  %v281 = vmax.f32 %v217, 0.0
  %v282 = vmax.f32 %v218, 0.0
  %v283 = vmax.f32 %v219, 0.0
  %284 = vst [vmem:[%s3] sm:$0xff] %v220
  %285 = vst [vmem:[%s3 + $0x8] sm:$0xff] %v221
  %286 = vst [vmem:[%s3 + $0x10] sm:$0xff] %v222
  %287 = vst [vmem:[%s3 + $0x18] sm:$0xff] %v223
  %288 = vst [vmem:[%s3 + $0x20] sm:$0xff] %v224
  %289 = vst [vmem:[%s3 + $0x28] sm:$0xff] %v225
  %290 = vst [vmem:[%s3 + $0x30] sm:$0xff] %v226
  %291 = vst [vmem:[%s3 + $0x38] sm:$0xff] %v227
  %292 = vst [vmem:[%s3 + $0x40] sm:$0xff] %v228
  %293 = vst [vmem:[%s3 + $0x48] sm:$0xff] %v229
  %294 = vst [vmem:[%s3 + $0x50] sm:$0xff] %v230
  %295 = vst [vmem:[%s3 + $0x58] sm:$0xff] %v231
  %296 = vst [vmem:[%s3 + $0x60] sm:$0xff] %v232
  %297 = vst [vmem:[%s3 + $0x68] sm:$0xff] %v233
  %298 = vst [vmem:[%s3 + $0x70] sm:$0xff] %v234
  %299 = vst [vmem:[%s3 + $0x78] sm:$0xff] %v235
  %300 = vst [vmem:[%s3 + $0x80] sm:$0xff] %v236
  %301 = vst [vmem:[%s3 + $0x88] sm:$0xff] %v237
  %302 = vst [vmem:[%s3 + $0x90] sm:$0xff] %v238
  %303 = vst [vmem:[%s3 + $0x98] sm:$0xff] %v239
  %304 = vst [vmem:[%s3 + $0xa0] sm:$0xff] %v240
  %305 = vst [vmem:[%s3 + $0xa8] sm:$0xff] %v241
  %306 = vst [vmem:[%s3 + $0xb0] sm:$0xff] %v242
  %307 = vst [vmem:[%s3 + $0xb8] sm:$0xff] %v243
  %308 = vst [vmem:[%s3 + $0xc0] sm:$0xff] %v244
  %309 = vst [vmem:[%s3 + $0xc8] sm:$0xff] %v245
  %310 = vst [vmem:[%s3 + $0xd0] sm:$0xff] %v246
  %311 = vst [vmem:[%s3 + $0xd8] sm:$0xff] %v247
  %312 = vst [vmem:[%s3 + $0xe0] sm:$0xff] %v248
  %313 = vst [vmem:[%s3 + $0xe8] sm:$0xff] %v249
  %314 = vst [vmem:[%s3 + $0xf0] sm:$0xff] %v250
  %315 = vst [vmem:[%s3 + $0xf8] sm:$0xff] %v251
  %316 = vst [vmem:[%s3 + $0x100] sm:$0xff] %v252
  %317 = vst [vmem:[%s3 + $0x108] sm:$0xff] %v253
  %318 = vst [vmem:[%s3 + $0x110] sm:$0xff] %v254
  %319 = vst [vmem:[%s3 + $0x118] sm:$0xff] %v255
  %320 = vst [vmem:[%s3 + $0x120] sm:$0xff] %v256
  %321 = vst [vmem:[%s3 + $0x128] sm:$0xff] %v257
  %322 = vst [vmem:[%s3 + $0x130] sm:$0xff] %v258
  %323 = vst [vmem:[%s3 + $0x138] sm:$0xff] %v259
  %324 = vst [vmem:[%s3 + $0x140] sm:$0xff] %v260
  %325 = vst [vmem:[%s3 + $0x148] sm:$0xff] %v261
  %326 = vst [vmem:[%s3 + $0x150] sm:$0xff] %v262
  %327 = vst [vmem:[%s3 + $0x158] sm:$0xff] %v263
  %328 = vst [vmem:[%s3 + $0x160] sm:$0xff] %v264
  %329 = vst [vmem:[%s3 + $0x168] sm:$0xff] %v265
  %330 = vst [vmem:[%s3 + $0x170] sm:$0xff] %v266
  %331 = vst [vmem:[%s3 + $0x178] sm:$0xff] %v267
  %332 = vst [vmem:[%s3 + $0x180] sm:$0xff] %v268
  %333 = vst [vmem:[%s3 + $0x188] sm:$0xff] %v269
  %334 = vst [vmem:[%s3 + $0x190] sm:$0xff] %v270
  %335 = vst [vmem:[%s3 + $0x198] sm:$0xff] %v271
  %336 = vst [vmem:[%s3 + $0x1a0] sm:$0xff] %v272
  %337 = vst [vmem:[%s3 + $0x1a8] sm:$0xff] %v273
  %338 = vst [vmem:[%s3 + $0x1b0] sm:$0xff] %v274
  %339 = vst [vmem:[%s3 + $0x1b8] sm:$0xff] %v275
  %340 = vst [vmem:[%s3 + $0x1c0] sm:$0xff] %v276
  %341 = vst [vmem:[%s3 + $0x1c8] sm:$0xff] %v277
  %342 = vst [vmem:[%s3 + $0x1d0] sm:$0xff] %v278
  %343 = vst [vmem:[%s3 + $0x1d8] sm:$0xff] %v279
  %344 = vst [vmem:[%s3 + $0x1e0] sm:$0xff] %v280
  %345 = vst [vmem:[%s3 + $0x1e8] sm:$0xff] %v281
  %346 = vst [vmem:[%s3 + $0x1f0] sm:$0xff] %v282
  %347 = vst [vmem:[%s3 + $0x1f8] sm:$0xff] %v283
  // Predicated region
  $region14: #{conv_block_forward.3} parent=0 // pred_check
    _
  $region15: #{conv_block_forward.3} parent=0 // pred_check_branch
    %349 = sbr.rel (0) target = $region17
  $region16: #{conv_block_forward.3} parent=0 // pred_region
    _
  $region17: #{conv_block_forward.3} parent=0 // pred_fallthru
    _
  // Predicated region
  $region18: #{conv_block_forward.3} parent=0 // pred_check
    _
  $region19: #{conv_block_forward.3} parent=0 // pred_check_branch
    %351 = sbr.rel (0) target = $region21
  $region20: #{conv_block_forward.3} parent=0 // pred_region
    _
  $region21: #{conv_block_forward.3} parent=0 // pred_fallthru
    _

// kernel: conv_block_forward.2
$region0: #{conv_block_forward.2}
  #allocation0 [shape = 'u32[]', space=smem, size = 0x4, offset = 0x4, fixed_abs, tag = 'smem constant byte address 0x4 - core index']
  #allocation1 [shape = 'u32[144,128]{1,0:T(1,128)}', space=vmem, size = 0x12000, scoped, tag = 'internal scratch']
  #allocation2 [shape = 'f32[256,128]{1,0:T(8,128)}', space=vmem, size = 0x20000, scoped, tag = 'scratch operand']
  %s0 = inlined_call_operand.vmem [shape: bf16[512,128], index: 0, kind: input, shape index: {}]
  %s1 = inlined_call_operand.vmem [shape: bf16[128,128], index: 1, kind: input, shape index: {}]
  %s2 = inlined_call_operand.vmem [shape: f32[512,128], index: 2, kind: output, shape index: {0}]
  %s3 = inlined_call_operand.vmem [shape: f32[2,2,128], index: 3, kind: output, shape index: {1}]
  %4 = xla_tuple %s2, %s3
  %s5 = sld [smem:[#allocation0]]
  $region57: #{conv_block_forward.2} parent=0
    _
  %s7 = ssub.s32 1, %s5
  %s8 = scalar_select 0, %s7, %s5
  loop: start=0, step=1, limit=4
  $region2: #{conv_block_forward.2} parent=0 // loop_pre_header
    _
  $region3: #{conv_block_forward.2} parent=0 // loop_header
    %s10 = sphi 0, %s14
    %p11 = scmp.ge.s32.totalorder %s10, 4
    %s17 = sphi 0, %s36
    %s18 = sphi 0, %s32
    %s19 = sphi 0, %s28
    %s20 = sphi 0, %s17
    %s21 = sphi 0, %s18
    %s22 = sphi 0, %s19
    %s23 = sphi 0, %s20
    %s24 = sphi 0, %s21
    %s25 = sphi 0, %s22
    %s41 = sphi 0, %s43
    %s44 = sphi 0, %s41
    %s45 = sphi 0, %s44
    %s61 = sphi 0, %s45
    %s69 = sphi 0, %s71
    %s72 = sphi 0, %s69
    %s73 = sphi 0, %s72
    %s89 = sphi 0, %s73
    %s97 = sphi 0, %s99
    %s100 = sphi 0, %s97
    %s101 = sphi 0, %s100
    %s117 = sphi 0, %s101
    %s125 = sphi 0, %s127
    %s128 = sphi 0, %s125
    %s129 = sphi 0, %s128
    %s145 = sphi 0, %s129
  $region4: #{conv_block_forward.2} parent=0 // loop_header_branch
    %13 = sbr.rel (%p11) target = $region8
  $region5: #{conv_block_forward.2} parent=0 // loop_body
    %s15 = ssub.s32 %s10, 1
    %s16 = ssub.s32 %s10, 2
    %s26 = sadd.s32 1, %s19
    %p27 = scmp.ge.s32.totalorder %s26, 1
    %s28 = scalar_select %p27, 0, %s26
    %s29 = sadd.s32 1, %s18
    %s30 = scalar_select %p27, %s29, %s18
    %p31 = scmp.ge.s32.totalorder %s30, 1
    %s32 = scalar_select %p31, 0, %s30
    %s33 = sadd.s32 1, %s17
    %s34 = scalar_select %p31, %s33, %s17
    %p35 = scmp.ge.s32.totalorder %s34, 2
    %s36 = scalar_select %p35, 0, %s34
    %s37 = ssub.s32 %s17, %s36
    %s38 = ssub.s32 %s19, %s28
    %s39 = sor.u32 %s37, %s38
    %p40 = scmp.eq.s32.totalorder %s39, 0
    %s42 = sadd.s32 %s41, 1
    %s43 = scalar_select %p40, %s41, %s42
    %p46 = pneg %p40
    %p47 = scmp.eq.s32.totalorder %s10, 1
    %p48 = por %p46, %p47
    %p49 = scmp.ne.s32.totalorder %s41, %s44
    %p50 = scmp.eq.s32.totalorder %s10, 0
    %p51 = por %p49, %p50
    %p52 = scmp.ne.s32.totalorder %s41, %s44
    %p53 = scmp.eq.s32.totalorder %s15, 1
    %p54 = por %p52, %p53
    %p55 = scmp.ne.s32.totalorder %s44, %s45
    %p56 = scmp.eq.s32.totalorder %s15, 0
    %p57 = por %p55, %p56
    %p58 = scmp.ne.s32.totalorder %s44, %s45
    %p59 = scmp.eq.s32.totalorder %s16, 1
    %p60 = por %p58, %p59
    %p62 = scmp.ne.s32.totalorder %s45, %s61
    %p63 = scmp.eq.s32.totalorder %s16, 0
    %p64 = por %p62, %p63
    %s65 = ssub.s32 %s19, %s28
    %s66 = ssub.s32 %s18, %s32
    %s67 = sor.u32 %s65, %s66
    %p68 = scmp.eq.s32.totalorder %s67, 0
    %s70 = sadd.s32 %s69, 1
    %s71 = scalar_select %p68, %s69, %s70
    %p74 = pneg %p68
    %p75 = scmp.eq.s32.totalorder %s10, 1
    %p76 = por %p74, %p75
    %p77 = scmp.ne.s32.totalorder %s69, %s72
    %p78 = scmp.eq.s32.totalorder %s10, 0
    %p79 = por %p77, %p78
    %p80 = scmp.ne.s32.totalorder %s69, %s72
    %p81 = scmp.eq.s32.totalorder %s15, 1
    %p82 = por %p80, %p81
    %p83 = scmp.ne.s32.totalorder %s72, %s73
    %p84 = scmp.eq.s32.totalorder %s15, 0
    %p85 = por %p83, %p84
    %p86 = scmp.ne.s32.totalorder %s72, %s73
    %p87 = scmp.eq.s32.totalorder %s16, 1
    %p88 = por %p86, %p87
    %p90 = scmp.ne.s32.totalorder %s73, %s89
    %p91 = scmp.eq.s32.totalorder %s16, 0
    %p92 = por %p90, %p91
    %s93 = ssub.s32 %s17, %s36
    %s94 = ssub.s32 %s18, %s32
    %s95 = sor.u32 %s93, %s94
    %p96 = scmp.eq.s32.totalorder %s95, 0
    %s98 = sadd.s32 %s97, 1
    %s99 = scalar_select %p96, %s97, %s98
    %p102 = pneg %p96
    %p103 = scmp.eq.s32.totalorder %s10, 1
    %p104 = por %p102, %p103
    %p105 = scmp.ne.s32.totalorder %s97, %s100
    %p106 = scmp.eq.s32.totalorder %s10, 0
    %p107 = por %p105, %p106
    %p108 = scmp.ne.s32.totalorder %s97, %s100
    %p109 = scmp.eq.s32.totalorder %s15, 1
    %p110 = por %p108, %p109
    %p111 = scmp.ne.s32.totalorder %s100, %s101
    %p112 = scmp.eq.s32.totalorder %s15, 0
    %p113 = por %p111, %p112
    %p114 = scmp.ne.s32.totalorder %s100, %s101
    %p115 = scmp.eq.s32.totalorder %s16, 1
    %p116 = por %p114, %p115
    %p118 = scmp.ne.s32.totalorder %s101, %s117
    %p119 = scmp.eq.s32.totalorder %s16, 0
    %p120 = por %p118, %p119
    %s121 = ssub.s32 %s17, %s36
    %s122 = ssub.s32 %s18, %s32
    %s123 = sor.u32 %s121, %s122
    %p124 = scmp.eq.s32.totalorder %s123, 0
    %s126 = sadd.s32 %s125, 1
    %s127 = scalar_select %p124, %s125, %s126
    %p130 = pneg %p124
    %p131 = scmp.eq.s32.totalorder %s10, 1
    %p132 = por %p130, %p131
    %p133 = scmp.ne.s32.totalorder %s125, %s128
    %p134 = scmp.eq.s32.totalorder %s10, 0
    %p135 = por %p133, %p134
    %p136 = scmp.ne.s32.totalorder %s125, %s128
    %p137 = scmp.eq.s32.totalorder %s15, 1
    %p138 = por %p136, %p137
    %p139 = scmp.ne.s32.totalorder %s128, %s129
    %p140 = scmp.eq.s32.totalorder %s15, 0
    %p141 = por %p139, %p140
    %p142 = scmp.ne.s32.totalorder %s128, %s129
    %p143 = scmp.eq.s32.totalorder %s16, 1
    %p144 = por %p142, %p143
    %p146 = scmp.ne.s32.totalorder %s129, %s145
    %p147 = scmp.eq.s32.totalorder %s16, 0
    %p148 = por %p146, %p147
    %p149 = scmp.le.s32.totalorder 1, %s10
    %p150 = scmp.lt.s32.totalorder %s10, 3
    %p151 = pnand %p149, %p150
    %p152 = pneg %p151
    // Predicated region
    $region9: #{conv_block_forward.2} parent=5 // pred_check
      _
    $region10: #{conv_block_forward.2} parent=5 // pred_check_branch
      %154 = sbr.rel (%p151) target = $region12
    $region11: #{conv_block_forward.2} parent=5 // pred_region
      %s155 = ssub.s32 %s10, 1
      // Predicated region
      $region13: #{conv_block_forward.2} parent=11 // pred_check
        %p156 = pneg %p85
      $region14: #{conv_block_forward.2} parent=11 // pred_check_branch
        %158 = sbr.rel (%p156) target = $region16
      $region15: #{conv_block_forward.2} parent=11 // pred_region
        %s159 = smul.u32 16, %s22
        %p160 = scmp.lt.s32.totalorder %s159, 15
        %s161 = scalar_select %p160, %s159, 15
        %p162 = scmp.lt.s32.totalorder %s21, 0
        %s163 = scalar_select %p162, %s21, 0
        %s164 = sadd.s32 %s163, %s161
        %s165 = smul.addr %s164, 4
        %s166 = scalar_lea.vmem %s1, %s165
        %s167 = smul.u32 16, %s22
      $region16: #{conv_block_forward.2} parent=11 // pred_fallthru
        _
    $region12: #{conv_block_forward.2} parent=5 // pred_fallthru
      _
    %p168 = scmp.lt.s32.totalorder %s10, 2
    // Predicated region
    $region17: #{conv_block_forward.2} parent=5 // pred_check
      %p169 = pneg %p168
    $region18: #{conv_block_forward.2} parent=5 // pred_check_branch
      %171 = sbr.rel (%p169) target = $region20
    $region19: #{conv_block_forward.2} parent=5 // pred_region
      // Predicated region
      $region21: #{conv_block_forward.2} parent=19 // pred_check
        %p172 = pneg %p51
      $region22: #{conv_block_forward.2} parent=19 // pred_check_branch
        %174 = sbr.rel (%p172) target = $region24
      $region23: #{conv_block_forward.2} parent=19 // pred_region
        %s175 = smul.u32 32, %s17
        %p176 = scmp.lt.s32.totalorder %s175, 63
        %s177 = scalar_select %p176, %s175, 63
        %p178 = scmp.lt.s32.totalorder %s19, 0
        %s179 = scalar_select %p178, %s19, 0
        %s180 = sadd.s32 %s179, %s177
        %s181 = smul.addr %s180, 4
        %s182 = scalar_lea.vmem %s0, %s181
        %s183 = smul.u32 32, %s17
      $region24: #{conv_block_forward.2} parent=19 // pred_fallthru
        _
    $region20: #{conv_block_forward.2} parent=5 // pred_fallthru
      _
    %p184 = scmp.le.s32.totalorder 1, %s10
    %p185 = scmp.lt.s32.totalorder %s10, 3
    %p186 = pnand %p184, %p185
    %p187 = pneg %p186
    // Predicated region
    $region25: #{conv_block_forward.2} parent=5 // pred_check
      _
    $region26: #{conv_block_forward.2} parent=5 // pred_check_branch
      %189 = sbr.rel (%p186) target = $region28
    $region27: #{conv_block_forward.2} parent=5 // pred_region
      %s190 = ssub.s32 %s10, 1
      %s191 = smul.u32 32, %s20
      %p192 = scmp.lt.s32.totalorder %s191, 63
      %s193 = scalar_select %p192, %s191, 63
      %p194 = scmp.lt.s32.totalorder %s22, 0
      %s195 = scalar_select %p194, %s22, 0
      %s196 = sadd.s32 %s195, %s193
      %s197 = smul.addr %s196, 4
      %s198 = scalar_lea.vmem %s0, %s197
      %p199 = pneg %p57
      %p200 = pneg %p54
      %s201 = smul.u32 16, %s22
      %p202 = scmp.lt.s32.totalorder %s201, 15
      %s203 = scalar_select %p202, %s201, 15
      %p204 = scmp.lt.s32.totalorder %s21, 0
      %s205 = scalar_select %p204, %s21, 0
      %s206 = sadd.s32 %s205, %s203
      %s207 = smul.addr %s206, 4
      %s208 = scalar_lea.vmem %s1, %s207
      %p209 = pneg %p85
      %p210 = pneg %p82
      %p211 = pneg %p113
      %p212 = pneg %p110
      %s213 = smul.u32 32, %s20
      %p214 = scmp.lt.s32.totalorder %s213, 63
      %s215 = scalar_select %p214, %s213, 63
      %p216 = scmp.lt.s32.totalorder %s21, 0
      %s217 = scalar_select %p216, %s21, 0
      %s218 = sadd.s32 %s217, %s215
      %s219 = smul.addr %s218, 8
      %s220 = scalar_lea.vmem %s2, %s219
      %p221 = pneg %p141
      %p222 = pneg %p138
      %p223 = scmp.lt.s32.totalorder %s20, 1
      %s224 = scalar_select %p223, %s20, 1
      %p225 = scmp.lt.s32.totalorder %s21, 0
      %s226 = scalar_select %p225, %s21, 0
      %s227 = sadd.s32 %s226, %s224
      %s228 = smul.addr %s227, 2
      %s229 = scalar_lea.vmem %s3, %s228
      %s230 = smul.u32 32, %s20
      %p231 = scmp.lt.s32.totalorder %s230, 63
      %s232 = scalar_select %p231, %s230, 63
      %p233 = scmp.lt.s32.totalorder %s22, 0
      %s234 = scalar_select %p233, %s22, 0
      %s235 = sadd.s32 %s234, %s232
      %s236 = smul.addr %s235, 4
      %s237 = scalar_lea.vmem %s0, %s236
      %s238 = smul.u32 32, %s20
      %s239 = smul.u32 16, %s22
      %p240 = scmp.lt.s32.totalorder %s239, 15
      %s241 = scalar_select %p240, %s239, 15
      %p242 = scmp.lt.s32.totalorder %s21, 0
      %s243 = scalar_select %p242, %s21, 0
      %s244 = sadd.s32 %s243, %s241
      %s245 = smul.addr %s244, 4
      %s246 = scalar_lea.vmem %s1, %s245
      %s247 = smul.u32 16, %s22
      %s248 = smul.u32 32, %s20
      %p249 = scmp.lt.s32.totalorder %s248, 63
      %s250 = scalar_select %p249, %s248, 63
      %p251 = scmp.lt.s32.totalorder %s21, 0
      %s252 = scalar_select %p251, %s21, 0
      %s253 = sadd.s32 %s252, %s250
      %s254 = smul.addr %s253, 8
      %s255 = scalar_lea.vmem %s2, %s254
      %s256 = smul.u32 32, %s20
      %p257 = scmp.lt.s32.totalorder %s20, 1
      %s258 = scalar_select %p257, %s20, 1
      %p259 = scmp.lt.s32.totalorder %s21, 0
      %s260 = scalar_select %p259, %s21, 0
      %s261 = sadd.s32 %s260, %s258
      %s262 = smul.addr %s261, 2
      %s263 = scalar_lea.vmem %s3, %s262
      %p265 = scmp.eq.s32.totalorder %s22, 0
      // Predicated region
      $region29: #{conv_block_forward.2} parent=27 // pred_check
        %p266 = pneg %p265
      $region30: #{conv_block_forward.2} parent=27 // pred_check_branch
        %268 = sbr.rel (%p266) target = $region32
      $region31: #{conv_block_forward.2} parent=27 // pred_region
        %269 = vst [vmem:[#allocation2] sm:$0xff] 0.0
        %270 = vst [vmem:[#allocation2 + $0x8] sm:$0xff] 0.0
        %271 = vst [vmem:[#allocation2 + $0x10] sm:$0xff] 0.0
        %272 = vst [vmem:[#allocation2 + $0x18] sm:$0xff] 0.0
        %273 = vst [vmem:[#allocation2 + $0x20] sm:$0xff] 0.0
        %274 = vst [vmem:[#allocation2 + $0x28] sm:$0xff] 0.0
        %275 = vst [vmem:[#allocation2 + $0x30] sm:$0xff] 0.0
        %276 = vst [vmem:[#allocation2 + $0x38] sm:$0xff] 0.0
        %277 = vst [vmem:[#allocation2 + $0x40] sm:$0xff] 0.0
        %278 = vst [vmem:[#allocation2 + $0x48] sm:$0xff] 0.0
        %279 = vst [vmem:[#allocation2 + $0x50] sm:$0xff] 0.0
        %280 = vst [vmem:[#allocation2 + $0x58] sm:$0xff] 0.0
        %281 = vst [vmem:[#allocation2 + $0x60] sm:$0xff] 0.0
        %282 = vst [vmem:[#allocation2 + $0x68] sm:$0xff] 0.0
        %283 = vst [vmem:[#allocation2 + $0x70] sm:$0xff] 0.0
        %284 = vst [vmem:[#allocation2 + $0x78] sm:$0xff] 0.0
        %285 = vst [vmem:[#allocation2 + $0x80] sm:$0xff] 0.0
        %286 = vst [vmem:[#allocation2 + $0x88] sm:$0xff] 0.0
        %287 = vst [vmem:[#allocation2 + $0x90] sm:$0xff] 0.0
        %288 = vst [vmem:[#allocation2 + $0x98] sm:$0xff] 0.0
        %289 = vst [vmem:[#allocation2 + $0xa0] sm:$0xff] 0.0
        %290 = vst [vmem:[#allocation2 + $0xa8] sm:$0xff] 0.0
        %291 = vst [vmem:[#allocation2 + $0xb0] sm:$0xff] 0.0
        %292 = vst [vmem:[#allocation2 + $0xb8] sm:$0xff] 0.0
        %293 = vst [vmem:[#allocation2 + $0xc0] sm:$0xff] 0.0
        %294 = vst [vmem:[#allocation2 + $0xc8] sm:$0xff] 0.0
        %295 = vst [vmem:[#allocation2 + $0xd0] sm:$0xff] 0.0
        %296 = vst [vmem:[#allocation2 + $0xd8] sm:$0xff] 0.0
        %297 = vst [vmem:[#allocation2 + $0xe0] sm:$0xff] 0.0
        %298 = vst [vmem:[#allocation2 + $0xe8] sm:$0xff] 0.0
        %299 = vst [vmem:[#allocation2 + $0xf0] sm:$0xff] 0.0
        %300 = vst [vmem:[#allocation2 + $0xf8] sm:$0xff] 0.0
      $region32: #{conv_block_forward.2} parent=27 // pred_fallthru
        _
      %v301 = vld [vmem:[#allocation2] sm:$0xff]
      %v302 = vld [vmem:[#allocation2 + $0x8] sm:$0xff]
      %v303 = vld [vmem:[#allocation2 + $0x10] sm:$0xff]
      %v304 = vld [vmem:[#allocation2 + $0x18] sm:$0xff]
      %v305 = vld [vmem:[#allocation2 + $0x20] sm:$0xff]
      %v306 = vld [vmem:[#allocation2 + $0x28] sm:$0xff]
      %v307 = vld [vmem:[#allocation2 + $0x30] sm:$0xff]
      %v308 = vld [vmem:[#allocation2 + $0x38] sm:$0xff]
      %v309 = vld [vmem:[#allocation2 + $0x40] sm:$0xff]
      %v310 = vld [vmem:[#allocation2 + $0x48] sm:$0xff]
      %v311 = vld [vmem:[#allocation2 + $0x50] sm:$0xff]
      %v312 = vld [vmem:[#allocation2 + $0x58] sm:$0xff]
      %v313 = vld [vmem:[#allocation2 + $0x60] sm:$0xff]
      %v314 = vld [vmem:[#allocation2 + $0x68] sm:$0xff]
      %v315 = vld [vmem:[#allocation2 + $0x70] sm:$0xff]
      %v316 = vld [vmem:[#allocation2 + $0x78] sm:$0xff]
      %v317 = vld [vmem:[#allocation2 + $0x80] sm:$0xff]
      %v318 = vld [vmem:[#allocation2 + $0x88] sm:$0xff]
      %v319 = vld [vmem:[#allocation2 + $0x90] sm:$0xff]
      %v320 = vld [vmem:[#allocation2 + $0x98] sm:$0xff]
      %v321 = vld [vmem:[#allocation2 + $0xa0] sm:$0xff]
      %v322 = vld [vmem:[#allocation2 + $0xa8] sm:$0xff]
      %v323 = vld [vmem:[#allocation2 + $0xb0] sm:$0xff]
      %v324 = vld [vmem:[#allocation2 + $0xb8] sm:$0xff]
      %v325 = vld [vmem:[#allocation2 + $0xc0] sm:$0xff]
      %v326 = vld [vmem:[#allocation2 + $0xc8] sm:$0xff]
      %v327 = vld [vmem:[#allocation2 + $0xd0] sm:$0xff]
      %v328 = vld [vmem:[#allocation2 + $0xd8] sm:$0xff]
      %v329 = vld [vmem:[#allocation2 + $0xe0] sm:$0xff]
      %v330 = vld [vmem:[#allocation2 + $0xe8] sm:$0xff]
      %v331 = vld [vmem:[#allocation2 + $0xf0] sm:$0xff]
      %v332 = vld [vmem:[#allocation2 + $0xf8] sm:$0xff]
      %v333 = vld [vmem:[%s237] sm:$0xf]
      %v334 = vld [vmem:[%s237 + $0x4] sm:$0xf]
      %v335 = vld [vmem:[%s237 + $0x8] sm:$0xf]
      %v336 = vld [vmem:[%s237 + $0xc] sm:$0xf]
      %v337 = vld [vmem:[%s237 + $0x10] sm:$0xf]
      %v338 = vld [vmem:[%s237 + $0x14] sm:$0xf]
      %v339 = vld [vmem:[%s237 + $0x18] sm:$0xf]
      %v340 = vld [vmem:[%s237 + $0x1c] sm:$0xf]
      %v341 = vld [vmem:[%s237 + $0x20] sm:$0xf]
      %v342 = vld [vmem:[%s237 + $0x24] sm:$0xf]
      %v343 = vld [vmem:[%s237 + $0x28] sm:$0xf]
      %v344 = vld [vmem:[%s237 + $0x2c] sm:$0xf]
      %v345 = vld [vmem:[%s237 + $0x30] sm:$0xf]
      %v346 = vld [vmem:[%s237 + $0x34] sm:$0xf]
      %v347 = vld [vmem:[%s237 + $0x38] sm:$0xf]
      %v348 = vld [vmem:[%s237 + $0x3c] sm:$0xf]
      %v349 = vld [vmem:[%s237 + $0x40] sm:$0xf]
      %v350 = vld [vmem:[%s237 + $0x44] sm:$0xf]
      %v351 = vld [vmem:[%s237 + $0x48] sm:$0xf]
      %v352 = vld [vmem:[%s237 + $0x4c] sm:$0xf]
      %v353 = vld [vmem:[%s237 + $0x50] sm:$0xf]
      %v354 = vld [vmem:[%s237 + $0x54] sm:$0xf]
      %v355 = vld [vmem:[%s237 + $0x58] sm:$0xf]
      %v356 = vld [vmem:[%s237 + $0x5c] sm:$0xf]
      %v357 = vld [vmem:[%s237 + $0x60] sm:$0xf]
      %v358 = vld [vmem:[%s237 + $0x64] sm:$0xf]
      %v359 = vld [vmem:[%s237 + $0x68] sm:$0xf]
      %v360 = vld [vmem:[%s237 + $0x6c] sm:$0xf]
      %v361 = vld [vmem:[%s237 + $0x70] sm:$0xf]
      %v362 = vld [vmem:[%s237 + $0x74] sm:$0xf]
      %v363 = vld [vmem:[%s237 + $0x78] sm:$0xf]
      %v364 = vld [vmem:[%s237 + $0x7c] sm:$0xf]
      %v365 = vld [vmem:[%s246] sm:$0xf]
      %v366 = vld [vmem:[%s246 + $0x4] sm:$0xf]
      %v367 = vld [vmem:[%s246 + $0x8] sm:$0xf]
      %v368 = vld [vmem:[%s246 + $0xc] sm:$0xf]
      %v369 = vld [vmem:[%s246 + $0x10] sm:$0xf]
      %v370 = vld [vmem:[%s246 + $0x14] sm:$0xf]
      %v371 = vld [vmem:[%s246 + $0x18] sm:$0xf]
      %v372 = vld [vmem:[%s246 + $0x1c] sm:$0xf]
      %v373 = vld [vmem:[%s246 + $0x20] sm:$0xf]
      %v374 = vld [vmem:[%s246 + $0x24] sm:$0xf]
      %v375 = vld [vmem:[%s246 + $0x28] sm:$0xf]
      %v376 = vld [vmem:[%s246 + $0x2c] sm:$0xf]
      %v377 = vld [vmem:[%s246 + $0x30] sm:$0xf]
      %v378 = vld [vmem:[%s246 + $0x34] sm:$0xf]
      %v379 = vld [vmem:[%s246 + $0x38] sm:$0xf]
      %v380 = vld [vmem:[%s246 + $0x3c] sm:$0xf]
      %v413 = vunpack.c.l.b16 %v333
      %v414 = vunpack.c.l.b16 %v334
      %v415 = vunpack.c.l.b16 %v335
      %v416 = vunpack.c.l.b16 %v336
      %v417 = vunpack.c.l.b16 %v337
      %v418 = vunpack.c.l.b16 %v338
      %v419 = vunpack.c.l.b16 %v339
      %v420 = vunpack.c.l.b16 %v340
      %v421 = vunpack.c.l.b16 %v341
      %v422 = vunpack.c.l.b16 %v342
      %v423 = vunpack.c.l.b16 %v343
      %v424 = vunpack.c.l.b16 %v344
      %v425 = vunpack.c.l.b16 %v345
      %v426 = vunpack.c.l.b16 %v346
      %v427 = vunpack.c.l.b16 %v347
      %v428 = vunpack.c.l.b16 %v348
      %v429 = vunpack.c.l.b16 %v349
      %v430 = vunpack.c.l.b16 %v350
      %v431 = vunpack.c.l.b16 %v351
      %v432 = vunpack.c.l.b16 %v352
      %v433 = vunpack.c.l.b16 %v353
      %v434 = vunpack.c.l.b16 %v354
      %v435 = vunpack.c.l.b16 %v355
      %v436 = vunpack.c.l.b16 %v356
      %v437 = vunpack.c.l.b16 %v357
      %v438 = vunpack.c.l.b16 %v358
      %v439 = vunpack.c.l.b16 %v359
      %v440 = vunpack.c.l.b16 %v360
      %v441 = vunpack.c.l.b16 %v361
      %v442 = vunpack.c.l.b16 %v362
      %v443 = vunpack.c.l.b16 %v363
      %v444 = vunpack.c.l.b16 %v364
      %v445 = vpack.c.b16 %v414, %v413
      %v446 = vpack.c.b16 %v416, %v415
      %v447 = vpack.c.b16 %v418, %v417
      %v448 = vpack.c.b16 %v420, %v419
      %v449 = vpack.c.b16 %v422, %v421
      %v450 = vpack.c.b16 %v424, %v423
      %v451 = vpack.c.b16 %v426, %v425
      %v452 = vpack.c.b16 %v428, %v427
      %v453 = vpack.c.b16 %v430, %v429
      %v454 = vpack.c.b16 %v432, %v431
      %v455 = vpack.c.b16 %v434, %v433
      %v456 = vpack.c.b16 %v436, %v435
      %v457 = vpack.c.b16 %v438, %v437
      %v458 = vpack.c.b16 %v440, %v439
      %v459 = vpack.c.b16 %v442, %v441
      %v460 = vpack.c.b16 %v444, %v443
      %v493 = vunpack.c.l.b16 %v365
      %v494 = vunpack.c.l.b16 %v366
      %v495 = vunpack.c.l.b16 %v367
      %v496 = vunpack.c.l.b16 %v368
      %v497 = vunpack.c.l.b16 %v369
      %v498 = vunpack.c.l.b16 %v370
      %v499 = vunpack.c.l.b16 %v371
      %v500 = vunpack.c.l.b16 %v372
      %v501 = vunpack.c.l.b16 %v373
      %v502 = vunpack.c.l.b16 %v374
      %v503 = vunpack.c.l.b16 %v375
      %v504 = vunpack.c.l.b16 %v376
      %v505 = vunpack.c.l.b16 %v377
      %v506 = vunpack.c.l.b16 %v378
      %v507 = vunpack.c.l.b16 %v379
      %v508 = vunpack.c.l.b16 %v380
      %v509 = vpack.c.b16 %v494, %v493
      %v510 = vpack.c.b16 %v496, %v495
      %v511 = vpack.c.b16 %v498, %v497
      %v512 = vpack.c.b16 %v500, %v499
      %v513 = vpack.c.b16 %v502, %v501
      %v514 = vpack.c.b16 %v504, %v503
      %v515 = vpack.c.b16 %v506, %v505
      %v516 = vpack.c.b16 %v508, %v507
      %525 = vmatprep.subr.bf16.mxu0 0
      %526 = vmatpush1.bf16.msra.mxu0 %v516
      %527 = vmatprep.subr.bf16.mxu0 0
      %528 = vmatpush1.bf16.msra.mxu0 %v515
      %529 = vmatprep.subr.bf16.mxu0 0
      %530 = vmatpush1.bf16.msra.mxu0 %v514
      %531 = vmatprep.subr.bf16.mxu0 0
      %532 = vmatpush1.bf16.msra.mxu0 %v513
      %533 = vmatprep.subr.bf16.mxu0 0
      %534 = vmatpush1.bf16.msra.mxu0 %v512
      %535 = vmatprep.subr.bf16.mxu0 0
      %536 = vmatpush1.bf16.msra.mxu0 %v511
      %537 = vmatprep.subr.bf16.mxu0 0
      %538 = vmatpush1.bf16.msra.mxu0 %v510
      %539 = vmatprep.subr.bf16.mxu0 0
      %540 = vmatpush1.bf16.msra.mxu0 %v509
      %541 = vmatprep.subr.bf16.mxu0 0
      %542 = vmatpush2.bf16.msra.mxu0 0
      %543 = vmatprep.subr.bf16.mxu0 0
      %544 = vmatpush2.bf16.msra.mxu0 0
      %545 = vmatprep.subr.bf16.mxu0 0
      %546 = vmatpush2.bf16.msra.mxu0 0
      %547 = vmatprep.subr.bf16.mxu0 0
      %548 = vmatpush2.bf16.msra.mxu0 0
      %549 = vmatprep.subr.bf16.mxu0 0
      %550 = vmatpush2.bf16.msra.mxu0 0
      %551 = vmatprep.subr.bf16.mxu0 0
      %552 = vmatpush2.bf16.msra.mxu0 0
      %553 = vmatprep.subr.bf16.mxu0 0
      %554 = vmatpush2.bf16.msra.mxu0 0
      %555 = vmatprep.subr.bf16.mxu0 0
      %556 = vmatpush2.bf16.msra.mxu0 0
      %557 = vmatprep.mubr.bf16.mxu0 0
      %558 = vmatmul.mubr.bf16.gmra.mxu0 %v445
      %v559 = vpop.f32.mrf.mxu0
      %v560 = vadd.f32 0.0, %v559
      %v561 = vpop.f32.mrf.mxu0
      %v562 = vpop.f32.mrf.mxu0
      %v563 = vadd.f32 0.0, %v562
      %v564 = vpop.f32.mrf.mxu0
      %565 = vmatprep.mubr.bf16.mxu0 0
      %566 = vmatmul.mubr.bf16.gmra.mxu0 %v446
      %v567 = vpop.f32.mrf.mxu0
      %v568 = vadd.f32 0.0, %v567
      %v569 = vpop.f32.mrf.mxu0
      %v570 = vpop.f32.mrf.mxu0
      %v571 = vadd.f32 0.0, %v570
      %v572 = vpop.f32.mrf.mxu0
      %573 = vmatprep.mubr.bf16.mxu0 0
      %574 = vmatmul.mubr.bf16.gmra.mxu0 %v447
      %v575 = vpop.f32.mrf.mxu0
      %v576 = vadd.f32 0.0, %v575
      %v577 = vpop.f32.mrf.mxu0
      %v578 = vpop.f32.mrf.mxu0
      %v579 = vadd.f32 0.0, %v578
      %v580 = vpop.f32.mrf.mxu0
      %581 = vmatprep.mubr.bf16.mxu0 0
      %582 = vmatmul.mubr.bf16.gmra.mxu0 %v448
      %v583 = vpop.f32.mrf.mxu0
      %v584 = vadd.f32 0.0, %v583
      %v585 = vpop.f32.mrf.mxu0
      %v586 = vpop.f32.mrf.mxu0
      %v587 = vadd.f32 0.0, %v586
      %v588 = vpop.f32.mrf.mxu0
      %589 = vmatprep.mubr.bf16.mxu0 0
      %590 = vmatmul.mubr.bf16.gmra.mxu0 %v449
      %v591 = vpop.f32.mrf.mxu0
      %v592 = vadd.f32 0.0, %v591
      %v593 = vpop.f32.mrf.mxu0
      %v594 = vpop.f32.mrf.mxu0
      %v595 = vadd.f32 0.0, %v594
      %v596 = vpop.f32.mrf.mxu0
      %597 = vmatprep.mubr.bf16.mxu0 0
      %598 = vmatmul.mubr.bf16.gmra.mxu0 %v450
      %v599 = vpop.f32.mrf.mxu0
      %v600 = vadd.f32 0.0, %v599
      %v601 = vpop.f32.mrf.mxu0
      %v602 = vpop.f32.mrf.mxu0
      %v603 = vadd.f32 0.0, %v602
      %v604 = vpop.f32.mrf.mxu0
      %605 = vmatprep.mubr.bf16.mxu0 0
      %606 = vmatmul.mubr.bf16.gmra.mxu0 %v451
      %v607 = vpop.f32.mrf.mxu0
      %v608 = vadd.f32 0.0, %v607
      %v609 = vpop.f32.mrf.mxu0
      %v610 = vpop.f32.mrf.mxu0
      %v611 = vadd.f32 0.0, %v610
      %v612 = vpop.f32.mrf.mxu0
      %613 = vmatprep.mubr.bf16.mxu0 0
      %614 = vmatmul.mubr.bf16.gmra.mxu0 %v452
      %v615 = vpop.f32.mrf.mxu0
      %v616 = vadd.f32 0.0, %v615
      %v617 = vpop.f32.mrf.mxu0
      %v618 = vpop.f32.mrf.mxu0
      %v619 = vadd.f32 0.0, %v618
      %v620 = vpop.f32.mrf.mxu0
      %621 = vmatprep.mubr.bf16.mxu0 0
      %622 = vmatmul.mubr.bf16.gmra.mxu0 %v453
      %v623 = vpop.f32.mrf.mxu0
      %v624 = vadd.f32 0.0, %v623
      %v625 = vpop.f32.mrf.mxu0
      %v626 = vpop.f32.mrf.mxu0
      %v627 = vadd.f32 0.0, %v626
      %v628 = vpop.f32.mrf.mxu0
      %629 = vmatprep.mubr.bf16.mxu0 0
      %630 = vmatmul.mubr.bf16.gmra.mxu0 %v454
      %v631 = vpop.f32.mrf.mxu0
      %v632 = vadd.f32 0.0, %v631
      %v633 = vpop.f32.mrf.mxu0
      %v634 = vpop.f32.mrf.mxu0
      %v635 = vadd.f32 0.0, %v634
      %v636 = vpop.f32.mrf.mxu0
      %637 = vmatprep.mubr.bf16.mxu0 0
      %638 = vmatmul.mubr.bf16.gmra.mxu0 %v455
      %v639 = vpop.f32.mrf.mxu0
      %v640 = vadd.f32 0.0, %v639
      %v641 = vpop.f32.mrf.mxu0
      %v642 = vpop.f32.mrf.mxu0
      %v643 = vadd.f32 0.0, %v642
      %v644 = vpop.f32.mrf.mxu0
      %645 = vmatprep.mubr.bf16.mxu0 0
      %646 = vmatmul.mubr.bf16.gmra.mxu0 %v456
      %v647 = vpop.f32.mrf.mxu0
      %v648 = vadd.f32 0.0, %v647
      %v649 = vpop.f32.mrf.mxu0
      %v650 = vpop.f32.mrf.mxu0
      %v651 = vadd.f32 0.0, %v650
      %v652 = vpop.f32.mrf.mxu0
      %653 = vmatprep.mubr.bf16.mxu0 0
      %654 = vmatmul.mubr.bf16.gmra.mxu0 %v457
      %v655 = vpop.f32.mrf.mxu0
      %v656 = vadd.f32 0.0, %v655
      %v657 = vpop.f32.mrf.mxu0
      %v658 = vpop.f32.mrf.mxu0
      %v659 = vadd.f32 0.0, %v658
      %v660 = vpop.f32.mrf.mxu0
      %661 = vmatprep.mubr.bf16.mxu0 0
      %662 = vmatmul.mubr.bf16.gmra.mxu0 %v458
      %v663 = vpop.f32.mrf.mxu0
      %v664 = vadd.f32 0.0, %v663
      %v665 = vpop.f32.mrf.mxu0
      %v666 = vpop.f32.mrf.mxu0
      %v667 = vadd.f32 0.0, %v666
      %v668 = vpop.f32.mrf.mxu0
      %669 = vmatprep.mubr.bf16.mxu0 0
      %670 = vmatmul.mubr.bf16.gmra.mxu0 %v459
      %v671 = vpop.f32.mrf.mxu0
      %v672 = vadd.f32 0.0, %v671
      %v673 = vpop.f32.mrf.mxu0
      %v674 = vpop.f32.mrf.mxu0
      %v675 = vadd.f32 0.0, %v674
      %v676 = vpop.f32.mrf.mxu0
      %677 = vmatprep.mubr.bf16.mxu0 0
      %678 = vmatmul.mubr.bf16.gmra.mxu0 %v460
      %v679 = vpop.f32.mrf.mxu0
      %v680 = vadd.f32 0.0, %v679
      %v681 = vpop.f32.mrf.mxu0
      %v682 = vpop.f32.mrf.mxu0
      %v683 = vadd.f32 0.0, %v682
      %v684 = vpop.f32.mrf.mxu0
      %685 = vdwg.mxu0
      %v686 = vadd.f32 %v301, %v560
      %v687 = vadd.f32 %v302, %v563
      %v688 = vadd.f32 %v303, %v568
      %v689 = vadd.f32 %v304, %v571
      %v690 = vadd.f32 %v305, %v576
      %v691 = vadd.f32 %v306, %v579
      %v692 = vadd.f32 %v307, %v584
      %v693 = vadd.f32 %v308, %v587
      %v694 = vadd.f32 %v309, %v592
      %v695 = vadd.f32 %v310, %v595
      %v696 = vadd.f32 %v311, %v600
      %v697 = vadd.f32 %v312, %v603
      %v698 = vadd.f32 %v313, %v608
      %v699 = vadd.f32 %v314, %v611
      %v700 = vadd.f32 %v315, %v616
      %v701 = vadd.f32 %v316, %v619
      %v702 = vadd.f32 %v317, %v624
      %v703 = vadd.f32 %v318, %v627
      %v704 = vadd.f32 %v319, %v632
      %v705 = vadd.f32 %v320, %v635
      %v706 = vadd.f32 %v321, %v640
      %v707 = vadd.f32 %v322, %v643
      %v708 = vadd.f32 %v323, %v648
      %v709 = vadd.f32 %v324, %v651
      %v710 = vadd.f32 %v325, %v656
      %v711 = vadd.f32 %v326, %v659
      %v712 = vadd.f32 %v327, %v664
      %v713 = vadd.f32 %v328, %v667
      %v714 = vadd.f32 %v329, %v672
      %v715 = vadd.f32 %v330, %v675
      %v716 = vadd.f32 %v331, %v680
      %v717 = vadd.f32 %v332, %v683
      %718 = vst [vmem:[#allocation2] sm:$0xff] %v686
      %719 = vst [vmem:[#allocation2 + $0x8] sm:$0xff] %v687
      %720 = vst [vmem:[#allocation2 + $0x10] sm:$0xff] %v688
      %721 = vst [vmem:[#allocation2 + $0x18] sm:$0xff] %v689
      %722 = vst [vmem:[#allocation2 + $0x20] sm:$0xff] %v690
      %723 = vst [vmem:[#allocation2 + $0x28] sm:$0xff] %v691
      %724 = vst [vmem:[#allocation2 + $0x30] sm:$0xff] %v692
      %725 = vst [vmem:[#allocation2 + $0x38] sm:$0xff] %v693
      %726 = vst [vmem:[#allocation2 + $0x40] sm:$0xff] %v694
      %727 = vst [vmem:[#allocation2 + $0x48] sm:$0xff] %v695
      %728 = vst [vmem:[#allocation2 + $0x50] sm:$0xff] %v696
      %729 = vst [vmem:[#allocation2 + $0x58] sm:$0xff] %v697
      %730 = vst [vmem:[#allocation2 + $0x60] sm:$0xff] %v698
      %731 = vst [vmem:[#allocation2 + $0x68] sm:$0xff] %v699
      %732 = vst [vmem:[#allocation2 + $0x70] sm:$0xff] %v700
      %733 = vst [vmem:[#allocation2 + $0x78] sm:$0xff] %v701
      %734 = vst [vmem:[#allocation2 + $0x80] sm:$0xff] %v702
      %735 = vst [vmem:[#allocation2 + $0x88] sm:$0xff] %v703
      %736 = vst [vmem:[#allocation2 + $0x90] sm:$0xff] %v704
      %737 = vst [vmem:[#allocation2 + $0x98] sm:$0xff] %v705
      %738 = vst [vmem:[#allocation2 + $0xa0] sm:$0xff] %v706
      %739 = vst [vmem:[#allocation2 + $0xa8] sm:$0xff] %v707
      %740 = vst [vmem:[#allocation2 + $0xb0] sm:$0xff] %v708
      %741 = vst [vmem:[#allocation2 + $0xb8] sm:$0xff] %v709
      %742 = vst [vmem:[#allocation2 + $0xc0] sm:$0xff] %v710
      %743 = vst [vmem:[#allocation2 + $0xc8] sm:$0xff] %v711
      %744 = vst [vmem:[#allocation2 + $0xd0] sm:$0xff] %v712
      %745 = vst [vmem:[#allocation2 + $0xd8] sm:$0xff] %v713
      %746 = vst [vmem:[#allocation2 + $0xe0] sm:$0xff] %v714
      %747 = vst [vmem:[#allocation2 + $0xe8] sm:$0xff] %v715
      %748 = vst [vmem:[#allocation2 + $0xf0] sm:$0xff] %v716
      %749 = vst [vmem:[#allocation2 + $0xf8] sm:$0xff] %v717
      // Predicated region
      $region33: #{conv_block_forward.2} parent=27 // pred_check
        %p750 = pneg %p265
      $region34: #{conv_block_forward.2} parent=27 // pred_check_branch
        %752 = sbr.rel (%p750) target = $region36
      $region35: #{conv_block_forward.2} parent=27 // pred_region
        %v753 = vld [vmem:[#allocation2] sm:$0xff]
        %v754 = vld [vmem:[#allocation2 + $0x8] sm:$0xff]
        %v755 = vld [vmem:[#allocation2 + $0x10] sm:$0xff]
        %v756 = vld [vmem:[#allocation2 + $0x18] sm:$0xff]
        %v757 = vld [vmem:[#allocation2 + $0x20] sm:$0xff]
        %v758 = vld [vmem:[#allocation2 + $0x28] sm:$0xff]
        %v759 = vld [vmem:[#allocation2 + $0x30] sm:$0xff]
        %v760 = vld [vmem:[#allocation2 + $0x38] sm:$0xff]
        %v761 = vld [vmem:[#allocation2 + $0x40] sm:$0xff]
        %v762 = vld [vmem:[#allocation2 + $0x48] sm:$0xff]
        %v763 = vld [vmem:[#allocation2 + $0x50] sm:$0xff]
        %v764 = vld [vmem:[#allocation2 + $0x58] sm:$0xff]
        %v765 = vld [vmem:[#allocation2 + $0x60] sm:$0xff]
        %v766 = vld [vmem:[#allocation2 + $0x68] sm:$0xff]
        %v767 = vld [vmem:[#allocation2 + $0x70] sm:$0xff]
        %v768 = vld [vmem:[#allocation2 + $0x78] sm:$0xff]
        %v769 = vld [vmem:[#allocation2 + $0x80] sm:$0xff]
        %v770 = vld [vmem:[#allocation2 + $0x88] sm:$0xff]
        %v771 = vld [vmem:[#allocation2 + $0x90] sm:$0xff]
        %v772 = vld [vmem:[#allocation2 + $0x98] sm:$0xff]
        %v773 = vld [vmem:[#allocation2 + $0xa0] sm:$0xff]
        %v774 = vld [vmem:[#allocation2 + $0xa8] sm:$0xff]
        %v775 = vld [vmem:[#allocation2 + $0xb0] sm:$0xff]
        %v776 = vld [vmem:[#allocation2 + $0xb8] sm:$0xff]
        %v777 = vld [vmem:[#allocation2 + $0xc0] sm:$0xff]
        %v778 = vld [vmem:[#allocation2 + $0xc8] sm:$0xff]
        %v779 = vld [vmem:[#allocation2 + $0xd0] sm:$0xff]
        %v780 = vld [vmem:[#allocation2 + $0xd8] sm:$0xff]
        %v781 = vld [vmem:[#allocation2 + $0xe0] sm:$0xff]
        %v782 = vld [vmem:[#allocation2 + $0xe8] sm:$0xff]
        %v783 = vld [vmem:[#allocation2 + $0xf0] sm:$0xff]
        %v784 = vld [vmem:[#allocation2 + $0xf8] sm:$0xff]
        %785 = vst [vmem:[%s255] sm:$0xff] %v753
        %786 = vst [vmem:[%s255 + $0x8] sm:$0xff] %v754
        %787 = vst [vmem:[%s255 + $0x10] sm:$0xff] %v755
        %788 = vst [vmem:[%s255 + $0x18] sm:$0xff] %v756
        %789 = vst [vmem:[%s255 + $0x20] sm:$0xff] %v757
        %790 = vst [vmem:[%s255 + $0x28] sm:$0xff] %v758
        %791 = vst [vmem:[%s255 + $0x30] sm:$0xff] %v759
        %792 = vst [vmem:[%s255 + $0x38] sm:$0xff] %v760
        %793 = vst [vmem:[%s255 + $0x40] sm:$0xff] %v761
        %794 = vst [vmem:[%s255 + $0x48] sm:$0xff] %v762
        %795 = vst [vmem:[%s255 + $0x50] sm:$0xff] %v763
        %796 = vst [vmem:[%s255 + $0x58] sm:$0xff] %v764
        %797 = vst [vmem:[%s255 + $0x60] sm:$0xff] %v765
        %798 = vst [vmem:[%s255 + $0x68] sm:$0xff] %v766
        %799 = vst [vmem:[%s255 + $0x70] sm:$0xff] %v767
        %800 = vst [vmem:[%s255 + $0x78] sm:$0xff] %v768
        %801 = vst [vmem:[%s255 + $0x80] sm:$0xff] %v769
        %802 = vst [vmem:[%s255 + $0x88] sm:$0xff] %v770
        %803 = vst [vmem:[%s255 + $0x90] sm:$0xff] %v771
        %804 = vst [vmem:[%s255 + $0x98] sm:$0xff] %v772
        %805 = vst [vmem:[%s255 + $0xa0] sm:$0xff] %v773
        %806 = vst [vmem:[%s255 + $0xa8] sm:$0xff] %v774
        %807 = vst [vmem:[%s255 + $0xb0] sm:$0xff] %v775
        %808 = vst [vmem:[%s255 + $0xb8] sm:$0xff] %v776
        %809 = vst [vmem:[%s255 + $0xc0] sm:$0xff] %v777
        %810 = vst [vmem:[%s255 + $0xc8] sm:$0xff] %v778
        %811 = vst [vmem:[%s255 + $0xd0] sm:$0xff] %v779
        %812 = vst [vmem:[%s255 + $0xd8] sm:$0xff] %v780
        %813 = vst [vmem:[%s255 + $0xe0] sm:$0xff] %v781
        %814 = vst [vmem:[%s255 + $0xe8] sm:$0xff] %v782
        %815 = vst [vmem:[%s255 + $0xf0] sm:$0xff] %v783
        %816 = vst [vmem:[%s255 + $0xf8] sm:$0xff] %v784
        %v817 = vadd.f32 %v753, %v754
        %v818 = vadd.f32 %v817, %v755
        %v819 = vadd.f32 %v818, %v756
        %v820 = vadd.f32 %v819, %v757
        %v821 = vadd.f32 %v820, %v758
        %v822 = vadd.f32 %v821, %v759
        %v823 = vadd.f32 %v822, %v760
        %v824 = vadd.f32 %v823, %v761
        %v825 = vadd.f32 %v824, %v762
        %v826 = vadd.f32 %v825, %v763
        %v827 = vadd.f32 %v826, %v764
        %v828 = vadd.f32 %v827, %v765
        %v829 = vadd.f32 %v828, %v766
        %v830 = vadd.f32 %v829, %v767
        %v831 = vadd.f32 %v830, %v768
        %v832 = vadd.f32 %v831, %v769
        %v833 = vadd.f32 %v832, %v770
        %v834 = vadd.f32 %v833, %v771
        %v835 = vadd.f32 %v834, %v772
        %v836 = vadd.f32 %v835, %v773
        %v837 = vadd.f32 %v836, %v774
        %v838 = vadd.f32 %v837, %v775
        %v839 = vadd.f32 %v838, %v776
        %v840 = vadd.f32 %v839, %v777
        %v841 = vadd.f32 %v840, %v778
        %v842 = vadd.f32 %v841, %v779
        %v843 = vadd.f32 %v842, %v780
        %v844 = vadd.f32 %v843, %v781
        %v845 = vadd.f32 %v844, %v782
        %v846 = vadd.f32 %v845, %v783
        %v847 = vadd.f32 %v846, %v784
        %v848 = vrot.slane %v847, 4
        %v849 = vadd.f32 %v847, %v848
        %v850 = vrot.slane %v849, 2
        %v851 = vadd.f32 %v849, %v850
        %v852 = vrot.slane %v851, 1
        %v853 = vadd.f32 %v851, %v852
        %v854 = vmul.f32 %v753, %v753
        %v855 = vmul.f32 %v754, %v754
        %v856 = vmul.f32 %v755, %v755
        %v857 = vmul.f32 %v756, %v756
        %v858 = vmul.f32 %v757, %v757
        %v859 = vmul.f32 %v758, %v758
        %v860 = vmul.f32 %v759, %v759
        %v861 = vmul.f32 %v760, %v760
        %v862 = vmul.f32 %v761, %v761
        %v863 = vmul.f32 %v762, %v762
        %v864 = vmul.f32 %v763, %v763
        %v865 = vmul.f32 %v764, %v764
        %v866 = vmul.f32 %v765, %v765
        %v867 = vmul.f32 %v766, %v766
        %v868 = vmul.f32 %v767, %v767
        %v869 = vmul.f32 %v768, %v768
        %v870 = vmul.f32 %v769, %v769
        %v871 = vmul.f32 %v770, %v770
        %v872 = vmul.f32 %v771, %v771
        %v873 = vmul.f32 %v772, %v772
        %v874 = vmul.f32 %v773, %v773
        %v875 = vmul.f32 %v774, %v774
        %v876 = vmul.f32 %v775, %v775
        %v877 = vmul.f32 %v776, %v776
        %v878 = vmul.f32 %v777, %v777
        %v879 = vmul.f32 %v778, %v778
        %v880 = vmul.f32 %v779, %v779
        %v881 = vmul.f32 %v780, %v780
        %v882 = vmul.f32 %v781, %v781
        %v883 = vmul.f32 %v782, %v782
        %v884 = vmul.f32 %v783, %v783
        %v885 = vmul.f32 %v784, %v784
        %v886 = vadd.f32 %v854, %v855
        %v887 = vadd.f32 %v886, %v856
        %v888 = vadd.f32 %v887, %v857
        %v889 = vadd.f32 %v888, %v858
        %v890 = vadd.f32 %v889, %v859
        %v891 = vadd.f32 %v890, %v860
        %v892 = vadd.f32 %v891, %v861
        %v893 = vadd.f32 %v892, %v862
        %v894 = vadd.f32 %v893, %v863
        %v895 = vadd.f32 %v894, %v864
        %v896 = vadd.f32 %v895, %v865
        %v897 = vadd.f32 %v896, %v866
        %v898 = vadd.f32 %v897, %v867
        %v899 = vadd.f32 %v898, %v868
        %v900 = vadd.f32 %v899, %v869
        %v901 = vadd.f32 %v900, %v870
        %v902 = vadd.f32 %v901, %v871
        %v903 = vadd.f32 %v902, %v872
        %v904 = vadd.f32 %v903, %v873
        %v905 = vadd.f32 %v904, %v874
        %v906 = vadd.f32 %v905, %v875
        %v907 = vadd.f32 %v906, %v876
        %v908 = vadd.f32 %v907, %v877
        %v909 = vadd.f32 %v908, %v878
        %v910 = vadd.f32 %v909, %v879
        %v911 = vadd.f32 %v910, %v880
        %v912 = vadd.f32 %v911, %v881
        %v913 = vadd.f32 %v912, %v882
        %v914 = vadd.f32 %v913, %v883
        %v915 = vadd.f32 %v914, %v884
        %v916 = vadd.f32 %v915, %v885
        %v917 = vrot.slane %v916, 4
        %v918 = vadd.f32 %v916, %v917
        %v919 = vrot.slane %v918, 2
        %v920 = vadd.f32 %v918, %v919
        %v921 = vrot.slane %v920, 1
        %v922 = vadd.f32 %v920, %v921
        %vm923 = vcmask 1040384
        %v924 = vsel %vm923, %v853, %v922
        %925 = vst [vmem:[%s263] sm:$0x3] %v924
      $region36: #{conv_block_forward.2} parent=27 // pred_fallthru
        _
      %s926 = smul.u32 32, %s20
      %p927 = scmp.lt.s32.totalorder %s926, 63
      %s928 = scalar_select %p927, %s926, 63
      %p929 = scmp.lt.s32.totalorder %s21, 0
      %s930 = scalar_select %p929, %s21, 0
      %s931 = sadd.s32 %s930, %s928
      %s932 = smul.addr %s931, 8
      %s933 = scalar_lea.vmem %s2, %s932
      %p934 = scmp.lt.s32.totalorder %s20, 1
      %s935 = scalar_select %p934, %s20, 1
      %p936 = scmp.lt.s32.totalorder %s21, 0
      %s937 = scalar_select %p936, %s21, 0
      %s938 = sadd.s32 %s937, %s935
      %s939 = smul.addr %s938, 2
      %s940 = scalar_lea.vmem %s3, %s939
      // Predicated region
      $region37: #{conv_block_forward.2} parent=27 // pred_check
        %p941 = pneg %p110
      $region38: #{conv_block_forward.2} parent=27 // pred_check_branch
        %943 = sbr.rel (%p941) target = $region40
      $region39: #{conv_block_forward.2} parent=27 // pred_region
        %s944 = smul.u32 32, %s20
      $region40: #{conv_block_forward.2} parent=27 // pred_fallthru
        _
      // Predicated region
      $region41: #{conv_block_forward.2} parent=27 // pred_check
        %p945 = pneg %p138
      $region42: #{conv_block_forward.2} parent=27 // pred_check_branch
        %947 = sbr.rel (%p945) target = $region44
      $region43: #{conv_block_forward.2} parent=27 // pred_region
        _
      $region44: #{conv_block_forward.2} parent=27 // pred_fallthru
        _
    $region28: #{conv_block_forward.2} parent=5 // pred_fallthru
      _
    %p948 = scmp.le.s32.totalorder 2, %s10
    // Predicated region
    $region45: #{conv_block_forward.2} parent=5 // pred_check
      %p949 = pneg %p948
    $region46: #{conv_block_forward.2} parent=5 // pred_check_branch
      %951 = sbr.rel (%p949) target = $region48
    $region47: #{conv_block_forward.2} parent=5 // pred_region
      %s952 = ssub.s32 %s10, 2
      // Predicated region
      $region49: #{conv_block_forward.2} parent=47 // pred_check
        %p953 = pneg %p116
      $region50: #{conv_block_forward.2} parent=47 // pred_check_branch
        %955 = sbr.rel (%p953) target = $region52
      $region51: #{conv_block_forward.2} parent=47 // pred_region
        %s956 = smul.u32 32, %s23
        %p957 = scmp.lt.s32.totalorder %s956, 63
        %s958 = scalar_select %p957, %s956, 63
        %p959 = scmp.lt.s32.totalorder %s24, 0
        %s960 = scalar_select %p959, %s24, 0
        %s961 = sadd.s32 %s960, %s958
        %s962 = smul.addr %s961, 8
        %s963 = scalar_lea.vmem %s2, %s962
      $region52: #{conv_block_forward.2} parent=47 // pred_fallthru
        _
      // Predicated region
      $region53: #{conv_block_forward.2} parent=47 // pred_check
        %p964 = pneg %p144
      $region54: #{conv_block_forward.2} parent=47 // pred_check_branch
        %966 = sbr.rel (%p964) target = $region56
      $region55: #{conv_block_forward.2} parent=47 // pred_region
        %p967 = scmp.lt.s32.totalorder %s23, 1
        %s968 = scalar_select %p967, %s23, 1
        %p969 = scmp.lt.s32.totalorder %s24, 0
        %s970 = scalar_select %p969, %s24, 0
        %s971 = sadd.s32 %s970, %s968
        %s972 = smul.addr %s971, 2
        %s973 = scalar_lea.vmem %s3, %s972
      $region56: #{conv_block_forward.2} parent=47 // pred_fallthru
        _
    $region48: #{conv_block_forward.2} parent=5 // pred_fallthru
      _
  $region6: #{conv_block_forward.2} parent=0 // loop_footer
    %s14 = sadd.s32 1, %s10
  $region7: #{conv_block_forward.2} parent=0 // loop_footer_branch
    %9 = sbr.rel target = $region3
  $region8: #{conv_block_forward.2} parent=0 // loop_exit
    _

</llo_original>
